<compile_context>
chip_gen: v6e
topology: v6e:2x2x1
jax: 0.10.0
libtpu: 0.0.40
codegen_flags: <defaults>
</compile_context>

<pallas_src>
import jax
import jax.numpy as jnp
from jax import lax
from jax.experimental import pallas as pl
from jax.experimental.pallas import tpu as pltpu

UPSAMPLE = 16  # four x2 nearest-neighbour upsamples


# ----------------------------------------------------------------------------
# Fused kernel: one grid step = one source row r of one image -> 16 output rows
# ----------------------------------------------------------------------------
def _fused_p5_upsample_conv_kernel(c5_prev_ref, c5_cur_ref, c5_next_ref,
                                   w5_ref, b5_ref, wbig_ref, b22_ref, o_ref):
    # c5_*_ref : (1, 1, W5, Cin)   C5 rows clamp(r-1), r, clamp(r+1)  (NHWC)
    # w5_ref   : (Cin, F)          1x1 conv weight, fpn scale pre-folded
    # b5_ref   : (1, F)            1x1 conv bias,   fpn scale pre-folded
    # wbig_ref : (3F, 9*Fo)        combined 3x3 weights (row-type x dx blocks)
    # b22_ref  : (1, Fo)
    # o_ref    : (1, UP, Wo, Fo)   output strip (rows [16r, 16r+16))
    W5 = c5_cur_ref.shape[2]
    F = w5_ref.shape[1]
    Fo = b22_ref.shape[1]
    UP = o_ref.shape[1]
    Wo = o_ref.shape[2]

    b5 = b5_ref[...]

    def p5_row(ref):  # 1x1 conv (+ folded fpn scale) on one C5 row -> (W5, F)
        return jnp.dot(ref[0, 0], w5_ref[...],
                       preferred_element_type=jnp.float32) + b5

    row_prev = p5_row(c5_prev_ref)   # P5[max(r-1, 0)]
    row_cur = p5_row(c5_cur_ref)     # P5[r]
    row_next = p5_row(c5_next_ref)   # P5[min(r+1, H5-1)]

    # One wide matmul: (W5, 3F) @ (3F, 9*Fo) -> all nine (row-type, dx) mixes.
    x = jnp.concatenate([row_prev, row_cur, row_next], axis=1)
    m_all = jnp.dot(x, wbig_ref[...], preferred_element_type=jnp.float32)

    ox = lax.broadcasted_iota(jnp.int32, (Wo, 1), 0)
    b22 = jnp.broadcast_to(b22_ref[...], (Wo, Fo))

    def expand(m, off):
        # m: (W5, Fo) per-source-column values -> (Wo, Fo) output columns.
        # The source column switches from c-1 to c at ox == c*UP + off,
        # off = +1 / 0 / -1 for the dx = 0 / 1 / 2 horizontal taps
        # (this also realizes the clamped "reflect" padding at the edges).
        out = jnp.broadcast_to(m[0:1, :], (Wo, Fo))
        for c in range(1, W5):
            out = jnp.where(ox >= c * UP + off,
                            jnp.broadcast_to(m[c:c + 1, :], (Wo, Fo)), out)
        return out

    offs = (1, 0, -1)
    rows = []
    for typ in range(3):             # 0 = top seam, 1 = interior, 2 = bottom
        acc = b22
        for dx in range(3):
            j = typ * 3 + dx
            acc = acc + expand(m_all[:, j * Fo:(j + 1) * Fo], offs[dx])
        rows.append(acc.astype(o_ref.dtype))
    top, bulk, bot = rows

    # Store row by row: live registers stay tiny (no (UP, Wo, Fo) accumulator).
    o_ref[0, 0] = top
    for p in range(1, UP - 1):
        o_ref[0, p] = bulk
    o_ref[0, UP - 1] = bot


# ----------------------------------------------------------------------------
# Host-side weight pre-combination for the fused kernel
# ----------------------------------------------------------------------------
def _build_combined_weight(w22_hwio):
    # w22_hwio: (3, 3, F, Fo)  ->  (3F, 9*Fo)
    # K blocks: [prev-row | cur-row | next-row];  N blocks: (row-type, dx).
    F, Fo = w22_hwio.shape[2], w22_hwio.shape[3]
    zero = jnp.zeros((F, Fo), w22_hwio.dtype)
    cols = []
    for typ in range(3):
        for dx in range(3):
            w0, w1, w2 = w22_hwio[0, dx], w22_hwio[1, dx], w22_hwio[2, dx]
            if typ == 0:      # top seam row: dy=0 reads row r-1, dy=1,2 read r
                ka, kb, kc = w0, w1 + w2, zero
            elif typ == 1:    # interior rows: all three taps read row r
                ka, kb, kc = zero, w0 + w1 + w2, zero
            else:             # bottom seam row: dy=0,1 read r, dy=2 reads r+1
                ka, kb, kc = zero, w0 + w1, w2
            cols.append(jnp.concatenate([ka, kb, kc], axis=0))
    return jnp.concatenate(cols, axis=1)


# ----------------------------------------------------------------------------
# PyramidFeatures_noSkip forward (NCHW in / NCHW out, like the PyTorch module)
# ----------------------------------------------------------------------------
def pyramid_features_no_skip(inputs, pt_params, fpn_weights):
    C2, C3, C4, C5 = inputs
    del C2, C3, C4  # dead branches in the reference forward (results overwritten)

    N, Cin, H5, W5 = C5.shape
    w5_oihw, b5_vec = pt_params["P5_1"]      # (F, Cin, 1, 1), (F,)
    w22_oihw, b22_vec = pt_params["P2_2"]    # (Fo, F, 3, 3), (Fo,)
    F = w5_oihw.shape[0]
    Fo = w22_oihw.shape[0]
    UP = UPSAMPLE
    Ho, Wo = UP * H5, UP * W5

    # Fold the scalar fpn weight into the 1x1 conv weight/bias (host side).
    scale = jnp.asarray(fpn_weights[0], jnp.float32)
    w5 = jnp.transpose(w5_oihw[:, :, 0, 0] * scale, (1, 0))        # (Cin, F)
    b5 = (b5_vec * scale).reshape(1, F)
    w22_hwio = jnp.transpose(w22_oihw, (2, 3, 1, 0))               # (3,3,F,Fo)
    wbig = _build_combined_weight(w22_hwio)                        # (3F, 9Fo)
    b22 = b22_vec.reshape(1, Fo)

    c5_nhwc = jnp.transpose(C5, (0, 2, 3, 1))    # tiny (N, H5, W5, Cin)

    row_spec = lambda idx_map: pl.BlockSpec((1, 1, W5, Cin), idx_map)
    out_nhwc = pl.pallas_call(
        _fused_p5_upsample_conv_kernel,
        out_shape=jax.ShapeDtypeStruct((N, Ho, Wo, Fo), C5.dtype),
        grid=(N, H5),
        in_specs=[
            row_spec(lambda n, r: (n, jnp.maximum(r - 1, 0), 0, 0)),
            row_spec(lambda n, r: (n, r, 0, 0)),
            row_spec(lambda n, r: (n, jnp.minimum(r + 1, H5 - 1), 0, 0)),
            pl.BlockSpec((Cin, F), lambda n, r: (0, 0)),
            pl.BlockSpec((1, F), lambda n, r: (0, 0)),
            pl.BlockSpec((3 * F, 9 * Fo), lambda n, r: (0, 0)),
            pl.BlockSpec((1, Fo), lambda n, r: (0, 0)),
        ],
        out_specs=pl.BlockSpec((1, UP, Wo, Fo), lambda n, r: (n, r, 0, 0)),
        compiler_params=pltpu.CompilerParams(
            dimension_semantics=("parallel", "parallel"),
            vmem_limit_bytes=32 * 1024 * 1024),
    )(c5_nhwc, c5_nhwc, c5_nhwc, w5, b5, wbig, b22)

    # NHWC -> NCHW to match the PyTorch module's output layout.
    return jnp.transpose(out_nhwc, (0, 3, 1, 2))


# ----------------------------------------------------------------------------
# Pure-JAX reference for verification
# ----------------------------------------------------------------------------
def reference(inputs, pt_params, fpn_weights):
    C5 = inputs[3]
    w5_oihw, b5 = pt_params["P5_1"]
    p5 = jnp.einsum("nchw,oc->nohw", C5, w5_oihw[:, :, 0, 0])
    p5 = (p5 + b5[None, :, None, None]) * fpn_weights[0]
    up = jnp.repeat(jnp.repeat(p5, 16, axis=2), 16, axis=3)
    pad = jnp.pad(up, ((0, 0), (0, 0), (1, 1), (1, 1)), mode="reflect")
    w22_oihw, b22 = pt_params["P2_2"]
    out = lax.conv_general_dilated(
        pad, w22_oihw, window_strides=(1, 1), padding="VALID",
        dimension_numbers=("NCHW", "OIHW", "NCHW"))
    return out + b22[None, :, None, None]


if __name__ == "__main__":
    key = jax.random.PRNGKey(0)
    N = 2
    C2_size, C3_size, C4_size, C5_size = 4, 8, 16, 32
    feature_size = 128
    fpn_weights = jnp.asarray([1.0, 0.8, 0.6, 0.4], jnp.float32)

    ks = jax.random.split(key, 16)

    def init_conv(kw, kb, cout, cin, kh, kwd):
        w = 0.05 * jax.random.normal(kw, (cout, cin, kh, kwd), jnp.float32)
        b = 0.05 * jax.random.normal(kb, (cout,), jnp.float32)
        return w, b

    pt_params = {
        "P5_1": init_conv(ks[0], ks[1], feature_size, C5_size, 1, 1),
        "P4_1": init_conv(ks[2], ks[3], feature_size, C4_size, 1, 1),
        "P3_1": init_conv(ks[4], ks[5], feature_size, C3_size, 1, 1),
        "P2_1": init_conv(ks[6], ks[7], feature_size, C2_size, 1, 1),
        "P2_2": init_conv(ks[8], ks[9], feature_size // 2, feature_size, 3, 3),
    }

    # FPN-style input pyramid (NCHW), small spatial sizes.
    C2 = jax.random.normal(ks[10], (N, C2_size, 16, 16), jnp.float32)
    C3 = jax.random.normal(ks[11], (N, C3_size, 8, 8), jnp.float32)
    C4 = jax.random.normal(ks[12], (N, C4_size, 4, 4), jnp.float32)
    C5 = jax.random.normal(ks[13], (N, C5_size, 2, 2), jnp.float32)
    inputs = (C2, C3, C4, C5)

    fwd = jax.jit(pyramid_features_no_skip)
    out = jax.block_until_ready(fwd(inputs, pt_params, fpn_weights))

    ref = jax.block_until_ready(reference(inputs, pt_params, fpn_weights))
    assert out.shape == (N, feature_size // 2, 32, 32), out.shape
    assert jnp.allclose(out, ref, atol=1e-4, rtol=1e-4), float(
        jnp.max(jnp.abs(out - ref)))

    print("KERNEL_OK")
</pallas_src>

<mosaic_0001>
module attributes {stable_mosaic.version = 11 : i64} {
  func.func @_fused_p5_upsample_conv_kernel(%arg0: i32, %arg1: i32, %arg2: memref<1x1x2x32xf32, #tpu.memory_space<vmem>>, %arg3: memref<1x1x2x32xf32, #tpu.memory_space<vmem>>, %arg4: memref<1x1x2x32xf32, #tpu.memory_space<vmem>>, %arg5: memref<32x128xf32, #tpu.memory_space<vmem>>, %arg6: memref<1x128xf32, #tpu.memory_space<vmem>>, %arg7: memref<384x576xf32, #tpu.memory_space<vmem>>, %arg8: memref<1x64xf32, #tpu.memory_space<vmem>>, %arg9: memref<1x16x32x64xf32, #tpu.memory_space<vmem>>) attributes {dimension_semantics = [#tpu.dimension_semantics<parallel>, #tpu.dimension_semantics<parallel>], iteration_bounds = array<i64: 2, 2>, scalar_prefetch = 0 : i64, scratch_operands = 0 : i64, tpu.core_type = #tpu.core_type<tc>, window_params = [{transform_indices = @transform_0, window_bounds = array<i64: 1, 1, 2, 32>}, {transform_indices = @transform_1, window_bounds = array<i64: 1, 1, 2, 32>}, {transform_indices = @transform_2, window_bounds = array<i64: 1, 1, 2, 32>}, {pipeline_mode = #tpu.pipeline_mode<synchronous>, transform_indices = @transform_3, window_bounds = array<i64: 32, 128>}, {pipeline_mode = #tpu.pipeline_mode<synchronous>, transform_indices = @transform_4, window_bounds = array<i64: 1, 128>}, {pipeline_mode = #tpu.pipeline_mode<synchronous>, transform_indices = @transform_5, window_bounds = array<i64: 384, 576>}, {pipeline_mode = #tpu.pipeline_mode<synchronous>, transform_indices = @transform_6, window_bounds = array<i64: 1, 64>}, {transform_indices = @transform_7, window_bounds = array<i64: 1, 16, 32, 64>}]} {
    %c0 = arith.constant 0 : index
    %c0_0 = arith.constant 0 : index
    %0 = vector.load %arg6[%c0, %c0_0] : memref<1x128xf32, #tpu.memory_space<vmem>>, vector<1x128xf32>
    %c0_1 = arith.constant 0 : index
    %c0_2 = arith.constant 0 : index
    %c0_3 = arith.constant 0 : index
    %c0_4 = arith.constant 0 : index
    %1 = vector.load %arg2[%c0_1, %c0_2, %c0_3, %c0_4] : memref<1x1x2x32xf32, #tpu.memory_space<vmem>>, vector<1x1x2x32xf32>
    %2 = vector.shape_cast %1 : vector<1x1x2x32xf32> to vector<2x32xf32>
    %c0_5 = arith.constant 0 : index
    %c0_6 = arith.constant 0 : index
    %3 = vector.load %arg5[%c0_5, %c0_6] : memref<32x128xf32, #tpu.memory_space<vmem>>, vector<32x128xf32>
    %cst = arith.constant dense<0.000000e+00> : vector<2x128xf32>
    %4 = tpu.matmul %2, %3, %cst {dimension_numbers = #tpu.dot_dimension_numbers<[1], [0], [0], [1], [0, 0, 1, 1], [], []>} : vector<2x32xf32>, vector<32x128xf32>, vector<2x128xf32> -> vector<2x128xf32>
    %5 = vector.broadcast %0 : vector<1x128xf32> to vector<2x128xf32>
    %6 = arith.addf %4, %5 : vector<2x128xf32>
    %c0_7 = arith.constant 0 : index
    %c0_8 = arith.constant 0 : index
    %c0_9 = arith.constant 0 : index
    %c0_10 = arith.constant 0 : index
    %7 = vector.load %arg3[%c0_7, %c0_8, %c0_9, %c0_10] : memref<1x1x2x32xf32, #tpu.memory_space<vmem>>, vector<1x1x2x32xf32>
    %8 = vector.shape_cast %7 : vector<1x1x2x32xf32> to vector<2x32xf32>
    %c0_11 = arith.constant 0 : index
    %c0_12 = arith.constant 0 : index
    %9 = vector.load %arg5[%c0_11, %c0_12] : memref<32x128xf32, #tpu.memory_space<vmem>>, vector<32x128xf32>
    %cst_13 = arith.constant dense<0.000000e+00> : vector<2x128xf32>
    %10 = tpu.matmul %8, %9, %cst_13 {dimension_numbers = #tpu.dot_dimension_numbers<[1], [0], [0], [1], [0, 0, 1, 1], [], []>} : vector<2x32xf32>, vector<32x128xf32>, vector<2x128xf32> -> vector<2x128xf32>
    %11 = vector.broadcast %0 : vector<1x128xf32> to vector<2x128xf32>
    %12 = arith.addf %10, %11 : vector<2x128xf32>
    %c0_14 = arith.constant 0 : index
    %c0_15 = arith.constant 0 : index
    %c0_16 = arith.constant 0 : index
    %c0_17 = arith.constant 0 : index
    %13 = vector.load %arg4[%c0_14, %c0_15, %c0_16, %c0_17] : memref<1x1x2x32xf32, #tpu.memory_space<vmem>>, vector<1x1x2x32xf32>
    %14 = vector.shape_cast %13 : vector<1x1x2x32xf32> to vector<2x32xf32>
    %c0_18 = arith.constant 0 : index
    %c0_19 = arith.constant 0 : index
    %15 = vector.load %arg5[%c0_18, %c0_19] : memref<32x128xf32, #tpu.memory_space<vmem>>, vector<32x128xf32>
    %cst_20 = arith.constant dense<0.000000e+00> : vector<2x128xf32>
    %16 = tpu.matmul %14, %15, %cst_20 {dimension_numbers = #tpu.dot_dimension_numbers<[1], [0], [0], [1], [0, 0, 1, 1], [], []>} : vector<2x32xf32>, vector<32x128xf32>, vector<2x128xf32> -> vector<2x128xf32>
    %17 = vector.broadcast %0 : vector<1x128xf32> to vector<2x128xf32>
    %18 = arith.addf %16, %17 : vector<2x128xf32>
    %19 = tpu.concatenate %6, %12, %18 in 1 : vector<2x128xf32>, vector<2x128xf32>, vector<2x128xf32> -> vector<2x384xf32>
    %c0_21 = arith.constant 0 : index
    %c0_22 = arith.constant 0 : index
    %20 = vector.load %arg7[%c0_21, %c0_22] : memref<384x576xf32, #tpu.memory_space<vmem>>, vector<384x576xf32>
    %cst_23 = arith.constant dense<0.000000e+00> : vector<2x576xf32>
    %21 = tpu.matmul %19, %20, %cst_23 {dimension_numbers = #tpu.dot_dimension_numbers<[1], [0], [0], [1], [0, 0, 1, 1], [], []>} : vector<2x384xf32>, vector<384x576xf32>, vector<2x576xf32> -> vector<2x576xf32>
    %22 = tpu.iota {dimensions = array<i32: 0>} : vector<32x1xi32>
    %c0_24 = arith.constant 0 : index
    %c0_25 = arith.constant 0 : index
    %23 = vector.load %arg8[%c0_24, %c0_25] : memref<1x64xf32, #tpu.memory_space<vmem>>, vector<1x64xf32>
    %24 = vector.shape_cast %23 : vector<1x64xf32> to vector<1x64xf32>
    %25 = vector.broadcast %24 : vector<1x64xf32> to vector<32x64xf32>
    %26 = vector.extract_strided_slice %21 {offsets = [0, 0], sizes = [2, 64], strides = [1, 1]} : vector<2x576xf32> to vector<2x64xf32>
    %27 = vector.extract_strided_slice %26 {offsets = [0, 0], sizes = [1, 64], strides = [1, 1]} : vector<2x64xf32> to vector<1x64xf32>
    %28 = vector.shape_cast %27 : vector<1x64xf32> to vector<1x64xf32>
    %29 = vector.broadcast %28 : vector<1x64xf32> to vector<32x64xf32>
    %c17_i32 = arith.constant 17 : i32
    %30 = vector.broadcast %c17_i32 : i32 to vector<32x1xi32>
    %31 = arith.cmpi sge, %22, %30 : vector<32x1xi32>
    %32 = vector.extract_strided_slice %26 {offsets = [1, 0], sizes = [1, 64], strides = [1, 1]} : vector<2x64xf32> to vector<1x64xf32>
    %33 = vector.shape_cast %32 : vector<1x64xf32> to vector<1x64xf32>
    %34 = vector.broadcast %33 : vector<1x64xf32> to vector<32x64xf32>
    %35 = vector.shape_cast %31 : vector<32x1xi1> to vector<32x1xi1>
    %36 = vector.broadcast %35 : vector<32x1xi1> to vector<32x64xi1>
    %37 = arith.select %36, %34, %29 : vector<32x64xi1>, vector<32x64xf32>
    %38 = arith.addf %25, %37 : vector<32x64xf32>
    %39 = vector.extract_strided_slice %21 {offsets = [0, 64], sizes = [2, 64], strides = [1, 1]} : vector<2x576xf32> to vector<2x64xf32>
    %40 = vector.extract_strided_slice %39 {offsets = [0, 0], sizes = [1, 64], strides = [1, 1]} : vector<2x64xf32> to vector<1x64xf32>
    %41 = vector.shape_cast %40 : vector<1x64xf32> to vector<1x64xf32>
    %42 = vector.broadcast %41 : vector<1x64xf32> to vector<32x64xf32>
    %c16_i32 = arith.constant 16 : i32
    %43 = vector.broadcast %c16_i32 : i32 to vector<32x1xi32>
    %44 = arith.cmpi sge, %22, %43 : vector<32x1xi32>
    %45 = vector.extract_strided_slice %39 {offsets = [1, 0], sizes = [1, 64], strides = [1, 1]} : vector<2x64xf32> to vector<1x64xf32>
    %46 = vector.shape_cast %45 : vector<1x64xf32> to vector<1x64xf32>
    %47 = vector.broadcast %46 : vector<1x64xf32> to vector<32x64xf32>
    %48 = vector.shape_cast %44 : vector<32x1xi1> to vector<32x1xi1>
    %49 = vector.broadcast %48 : vector<32x1xi1> to vector<32x64xi1>
    %50 = arith.select %49, %47, %42 : vector<32x64xi1>, vector<32x64xf32>
    %51 = arith.addf %38, %50 : vector<32x64xf32>
    %52 = vector.extract_strided_slice %21 {offsets = [0, 128], sizes = [2, 64], strides = [1, 1]} : vector<2x576xf32> to vector<2x64xf32>
    %53 = vector.extract_strided_slice %52 {offsets = [0, 0], sizes = [1, 64], strides = [1, 1]} : vector<2x64xf32> to vector<1x64xf32>
    %54 = vector.shape_cast %53 : vector<1x64xf32> to vector<1x64xf32>
    %55 = vector.broadcast %54 : vector<1x64xf32> to vector<32x64xf32>
    %c15_i32 = arith.constant 15 : i32
    %56 = vector.broadcast %c15_i32 : i32 to vector<32x1xi32>
    %57 = arith.cmpi sge, %22, %56 : vector<32x1xi32>
    %58 = vector.extract_strided_slice %52 {offsets = [1, 0], sizes = [1, 64], strides = [1, 1]} : vector<2x64xf32> to vector<1x64xf32>
    %59 = vector.shape_cast %58 : vector<1x64xf32> to vector<1x64xf32>
    %60 = vector.broadcast %59 : vector<1x64xf32> to vector<32x64xf32>
    %61 = vector.shape_cast %57 : vector<32x1xi1> to vector<32x1xi1>
    %62 = vector.broadcast %61 : vector<32x1xi1> to vector<32x64xi1>
    %63 = arith.select %62, %60, %55 : vector<32x64xi1>, vector<32x64xf32>
    %64 = arith.addf %51, %63 : vector<32x64xf32>
    %65 = vector.extract_strided_slice %21 {offsets = [0, 192], sizes = [2, 64], strides = [1, 1]} : vector<2x576xf32> to vector<2x64xf32>
    %66 = vector.extract_strided_slice %65 {offsets = [0, 0], sizes = [1, 64], strides = [1, 1]} : vector<2x64xf32> to vector<1x64xf32>
    %67 = vector.shape_cast %66 : vector<1x64xf32> to vector<1x64xf32>
    %68 = vector.broadcast %67 : vector<1x64xf32> to vector<32x64xf32>
    %c17_i32_26 = arith.constant 17 : i32
    %69 = vector.broadcast %c17_i32_26 : i32 to vector<32x1xi32>
    %70 = arith.cmpi sge, %22, %69 : vector<32x1xi32>
    %71 = vector.extract_strided_slice %65 {offsets = [1, 0], sizes = [1, 64], strides = [1, 1]} : vector<2x64xf32> to vector<1x64xf32>
    %72 = vector.shape_cast %71 : vector<1x64xf32> to vector<1x64xf32>
    %73 = vector.broadcast %72 : vector<1x64xf32> to vector<32x64xf32>
    %74 = vector.shape_cast %70 : vector<32x1xi1> to vector<32x1xi1>
    %75 = vector.broadcast %74 : vector<32x1xi1> to vector<32x64xi1>
    %76 = arith.select %75, %73, %68 : vector<32x64xi1>, vector<32x64xf32>
    %77 = arith.addf %25, %76 : vector<32x64xf32>
    %78 = vector.extract_strided_slice %21 {offsets = [0, 256], sizes = [2, 64], strides = [1, 1]} : vector<2x576xf32> to vector<2x64xf32>
    %79 = vector.extract_strided_slice %78 {offsets = [0, 0], sizes = [1, 64], strides = [1, 1]} : vector<2x64xf32> to vector<1x64xf32>
    %80 = vector.shape_cast %79 : vector<1x64xf32> to vector<1x64xf32>
    %81 = vector.broadcast %80 : vector<1x64xf32> to vector<32x64xf32>
    %c16_i32_27 = arith.constant 16 : i32
    %82 = vector.broadcast %c16_i32_27 : i32 to vector<32x1xi32>
    %83 = arith.cmpi sge, %22, %82 : vector<32x1xi32>
    %84 = vector.extract_strided_slice %78 {offsets = [1, 0], sizes = [1, 64], strides = [1, 1]} : vector<2x64xf32> to vector<1x64xf32>
    %85 = vector.shape_cast %84 : vector<1x64xf32> to vector<1x64xf32>
    %86 = vector.broadcast %85 : vector<1x64xf32> to vector<32x64xf32>
    %87 = vector.shape_cast %83 : vector<32x1xi1> to vector<32x1xi1>
    %88 = vector.broadcast %87 : vector<32x1xi1> to vector<32x64xi1>
    %89 = arith.select %88, %86, %81 : vector<32x64xi1>, vector<32x64xf32>
    %90 = arith.addf %77, %89 : vector<32x64xf32>
    %91 = vector.extract_strided_slice %21 {offsets = [0, 320], sizes = [2, 64], strides = [1, 1]} : vector<2x576xf32> to vector<2x64xf32>
    %92 = vector.extract_strided_slice %91 {offsets = [0, 0], sizes = [1, 64], strides = [1, 1]} : vector<2x64xf32> to vector<1x64xf32>
    %93 = vector.shape_cast %92 : vector<1x64xf32> to vector<1x64xf32>
    %94 = vector.broadcast %93 : vector<1x64xf32> to vector<32x64xf32>
    %c15_i32_28 = arith.constant 15 : i32
    %95 = vector.broadcast %c15_i32_28 : i32 to vector<32x1xi32>
    %96 = arith.cmpi sge, %22, %95 : vector<32x1xi32>
    %97 = vector.extract_strided_slice %91 {offsets = [1, 0], sizes = [1, 64], strides = [1, 1]} : vector<2x64xf32> to vector<1x64xf32>
    %98 = vector.shape_cast %97 : vector<1x64xf32> to vector<1x64xf32>
    %99 = vector.broadcast %98 : vector<1x64xf32> to vector<32x64xf32>
    %100 = vector.shape_cast %96 : vector<32x1xi1> to vector<32x1xi1>
    %101 = vector.broadcast %100 : vector<32x1xi1> to vector<32x64xi1>
    %102 = arith.select %101, %99, %94 : vector<32x64xi1>, vector<32x64xf32>
    %103 = arith.addf %90, %102 : vector<32x64xf32>
    %104 = vector.extract_strided_slice %21 {offsets = [0, 384], sizes = [2, 64], strides = [1, 1]} : vector<2x576xf32> to vector<2x64xf32>
    %105 = vector.extract_strided_slice %104 {offsets = [0, 0], sizes = [1, 64], strides = [1, 1]} : vector<2x64xf32> to vector<1x64xf32>
    %106 = vector.shape_cast %105 : vector<1x64xf32> to vector<1x64xf32>
    %107 = vector.broadcast %106 : vector<1x64xf32> to vector<32x64xf32>
    %c17_i32_29 = arith.constant 17 : i32
    %108 = vector.broadcast %c17_i32_29 : i32 to vector<32x1xi32>
    %109 = arith.cmpi sge, %22, %108 : vector<32x1xi32>
    %110 = vector.extract_strided_slice %104 {offsets = [1, 0], sizes = [1, 64], strides = [1, 1]} : vector<2x64xf32> to vector<1x64xf32>
    %111 = vector.shape_cast %110 : vector<1x64xf32> to vector<1x64xf32>
    %112 = vector.broadcast %111 : vector<1x64xf32> to vector<32x64xf32>
    %113 = vector.shape_cast %109 : vector<32x1xi1> to vector<32x1xi1>
    %114 = vector.broadcast %113 : vector<32x1xi1> to vector<32x64xi1>
    %115 = arith.select %114, %112, %107 : vector<32x64xi1>, vector<32x64xf32>
    %116 = arith.addf %25, %115 : vector<32x64xf32>
    %117 = vector.extract_strided_slice %21 {offsets = [0, 448], sizes = [2, 64], strides = [1, 1]} : vector<2x576xf32> to vector<2x64xf32>
    %118 = vector.extract_strided_slice %117 {offsets = [0, 0], sizes = [1, 64], strides = [1, 1]} : vector<2x64xf32> to vector<1x64xf32>
    %119 = vector.shape_cast %118 : vector<1x64xf32> to vector<1x64xf32>
    %120 = vector.broadcast %119 : vector<1x64xf32> to vector<32x64xf32>
    %c16_i32_30 = arith.constant 16 : i32
    %121 = vector.broadcast %c16_i32_30 : i32 to vector<32x1xi32>
    %122 = arith.cmpi sge, %22, %121 : vector<32x1xi32>
    %123 = vector.extract_strided_slice %117 {offsets = [1, 0], sizes = [1, 64], strides = [1, 1]} : vector<2x64xf32> to vector<1x64xf32>
    %124 = vector.shape_cast %123 : vector<1x64xf32> to vector<1x64xf32>
    %125 = vector.broadcast %124 : vector<1x64xf32> to vector<32x64xf32>
    %126 = vector.shape_cast %122 : vector<32x1xi1> to vector<32x1xi1>
    %127 = vector.broadcast %126 : vector<32x1xi1> to vector<32x64xi1>
    %128 = arith.select %127, %125, %120 : vector<32x64xi1>, vector<32x64xf32>
    %129 = arith.addf %116, %128 : vector<32x64xf32>
    %130 = vector.extract_strided_slice %21 {offsets = [0, 512], sizes = [2, 64], strides = [1, 1]} : vector<2x576xf32> to vector<2x64xf32>
    %131 = vector.extract_strided_slice %130 {offsets = [0, 0], sizes = [1, 64], strides = [1, 1]} : vector<2x64xf32> to vector<1x64xf32>
    %132 = vector.shape_cast %131 : vector<1x64xf32> to vector<1x64xf32>
    %133 = vector.broadcast %132 : vector<1x64xf32> to vector<32x64xf32>
    %c15_i32_31 = arith.constant 15 : i32
    %134 = vector.broadcast %c15_i32_31 : i32 to vector<32x1xi32>
    %135 = arith.cmpi sge, %22, %134 : vector<32x1xi32>
    %136 = vector.extract_strided_slice %130 {offsets = [1, 0], sizes = [1, 64], strides = [1, 1]} : vector<2x64xf32> to vector<1x64xf32>
    %137 = vector.shape_cast %136 : vector<1x64xf32> to vector<1x64xf32>
    %138 = vector.broadcast %137 : vector<1x64xf32> to vector<32x64xf32>
    %139 = vector.shape_cast %135 : vector<32x1xi1> to vector<32x1xi1>
    %140 = vector.broadcast %139 : vector<32x1xi1> to vector<32x64xi1>
    %141 = arith.select %140, %138, %133 : vector<32x64xi1>, vector<32x64xf32>
    %142 = arith.addf %129, %141 : vector<32x64xf32>
    %c0_32 = arith.constant 0 : index
    %c0_33 = arith.constant 0 : index
    %c0_34 = arith.constant 0 : index
    %c0_35 = arith.constant 0 : index
    %143 = vector.load %arg9[%c0_32, %c0_33, %c0_34, %c0_35] : memref<1x16x32x64xf32, #tpu.memory_space<vmem>>, vector<1x1x32x64xf32>
    %144 = vector.shape_cast %143 : vector<1x1x32x64xf32> to vector<32x64xf32>
    %145 = vector.shape_cast %64 : vector<32x64xf32> to vector<1x1x32x64xf32>
    tpu.vector_store %arg9[%c0_32, %c0_33, %c0_34, %c0_35], %145 {strides = array<i32>} : memref<1x16x32x64xf32, #tpu.memory_space<vmem>>, vector<1x1x32x64xf32>,
    %c0_36 = arith.constant 0 : index
    %c1 = arith.constant 1 : index
    %c0_37 = arith.constant 0 : index
    %c0_38 = arith.constant 0 : index
    %146 = vector.load %arg9[%c0_36, %c1, %c0_37, %c0_38] : memref<1x16x32x64xf32, #tpu.memory_space<vmem>>, vector<1x1x32x64xf32>
    %147 = vector.shape_cast %146 : vector<1x1x32x64xf32> to vector<32x64xf32>
    %148 = vector.shape_cast %103 : vector<32x64xf32> to vector<1x1x32x64xf32>
    tpu.vector_store %arg9[%c0_36, %c1, %c0_37, %c0_38], %148 {strides = array<i32>} : memref<1x16x32x64xf32, #tpu.memory_space<vmem>>, vector<1x1x32x64xf32>,
    %c0_39 = arith.constant 0 : index
    %c2 = arith.constant 2 : index
    %c0_40 = arith.constant 0 : index
    %c0_41 = arith.constant 0 : index
    %149 = vector.load %arg9[%c0_39, %c2, %c0_40, %c0_41] : memref<1x16x32x64xf32, #tpu.memory_space<vmem>>, vector<1x1x32x64xf32>
    %150 = vector.shape_cast %149 : vector<1x1x32x64xf32> to vector<32x64xf32>
    %151 = vector.shape_cast %103 : vector<32x64xf32> to vector<1x1x32x64xf32>
    tpu.vector_store %arg9[%c0_39, %c2, %c0_40, %c0_41], %151 {strides = array<i32>} : memref<1x16x32x64xf32, #tpu.memory_space<vmem>>, vector<1x1x32x64xf32>,
    %c0_42 = arith.constant 0 : index
    %c3 = arith.constant 3 : index
    %c0_43 = arith.constant 0 : index
    %c0_44 = arith.constant 0 : index
    %152 = vector.load %arg9[%c0_42, %c3, %c0_43, %c0_44] : memref<1x16x32x64xf32, #tpu.memory_space<vmem>>, vector<1x1x32x64xf32>
    %153 = vector.shape_cast %152 : vector<1x1x32x64xf32> to vector<32x64xf32>
    %154 = vector.shape_cast %103 : vector<32x64xf32> to vector<1x1x32x64xf32>
    tpu.vector_store %arg9[%c0_42, %c3, %c0_43, %c0_44], %154 {strides = array<i32>} : memref<1x16x32x64xf32, #tpu.memory_space<vmem>>, vector<1x1x32x64xf32>,
    %c0_45 = arith.constant 0 : index
    %c4 = arith.constant 4 : index
    %c0_46 = arith.constant 0 : index
    %c0_47 = arith.constant 0 : index
    %155 = vector.load %arg9[%c0_45, %c4, %c0_46, %c0_47] : memref<1x16x32x64xf32, #tpu.memory_space<vmem>>, vector<1x1x32x64xf32>
    %156 = vector.shape_cast %155 : vector<1x1x32x64xf32> to vector<32x64xf32>
    %157 = vector.shape_cast %103 : vector<32x64xf32> to vector<1x1x32x64xf32>
    tpu.vector_store %arg9[%c0_45, %c4, %c0_46, %c0_47], %157 {strides = array<i32>} : memref<1x16x32x64xf32, #tpu.memory_space<vmem>>, vector<1x1x32x64xf32>,
    %c0_48 = arith.constant 0 : index
    %c5 = arith.constant 5 : index
    %c0_49 = arith.constant 0 : index
    %c0_50 = arith.constant 0 : index
    %158 = vector.load %arg9[%c0_48, %c5, %c0_49, %c0_50] : memref<1x16x32x64xf32, #tpu.memory_space<vmem>>, vector<1x1x32x64xf32>
    %159 = vector.shape_cast %158 : vector<1x1x32x64xf32> to vector<32x64xf32>
    %160 = vector.shape_cast %103 : vector<32x64xf32> to vector<1x1x32x64xf32>
    tpu.vector_store %arg9[%c0_48, %c5, %c0_49, %c0_50], %160 {strides = array<i32>} : memref<1x16x32x64xf32, #tpu.memory_space<vmem>>, vector<1x1x32x64xf32>,
    %c0_51 = arith.constant 0 : index
    %c6 = arith.constant 6 : index
    %c0_52 = arith.constant 0 : index
    %c0_53 = arith.constant 0 : index
    %161 = vector.load %arg9[%c0_51, %c6, %c0_52, %c0_53] : memref<1x16x32x64xf32, #tpu.memory_space<vmem>>, vector<1x1x32x64xf32>
    %162 = vector.shape_cast %161 : vector<1x1x32x64xf32> to vector<32x64xf32>
    %163 = vector.shape_cast %103 : vector<32x64xf32> to vector<1x1x32x64xf32>
    tpu.vector_store %arg9[%c0_51, %c6, %c0_52, %c0_53], %163 {strides = array<i32>} : memref<1x16x32x64xf32, #tpu.memory_space<vmem>>, vector<1x1x32x64xf32>,
    %c0_54 = arith.constant 0 : index
    %c7 = arith.constant 7 : index
    %c0_55 = arith.constant 0 : index
    %c0_56 = arith.constant 0 : index
    %164 = vector.load %arg9[%c0_54, %c7, %c0_55, %c0_56] : memref<1x16x32x64xf32, #tpu.memory_space<vmem>>, vector<1x1x32x64xf32>
    %165 = vector.shape_cast %164 : vector<1x1x32x64xf32> to vector<32x64xf32>
    %166 = vector.shape_cast %103 : vector<32x64xf32> to vector<1x1x32x64xf32>
    tpu.vector_store %arg9[%c0_54, %c7, %c0_55, %c0_56], %166 {strides = array<i32>} : memref<1x16x32x64xf32, #tpu.memory_space<vmem>>, vector<1x1x32x64xf32>,
    %c0_57 = arith.constant 0 : index
    %c8 = arith.constant 8 : index
    %c0_58 = arith.constant 0 : index
    %c0_59 = arith.constant 0 : index
    %167 = vector.load %arg9[%c0_57, %c8, %c0_58, %c0_59] : memref<1x16x32x64xf32, #tpu.memory_space<vmem>>, vector<1x1x32x64xf32>
    %168 = vector.shape_cast %167 : vector<1x1x32x64xf32> to vector<32x64xf32>
    %169 = vector.shape_cast %103 : vector<32x64xf32> to vector<1x1x32x64xf32>
    tpu.vector_store %arg9[%c0_57, %c8, %c0_58, %c0_59], %169 {strides = array<i32>} : memref<1x16x32x64xf32, #tpu.memory_space<vmem>>, vector<1x1x32x64xf32>,
    %c0_60 = arith.constant 0 : index
    %c9 = arith.constant 9 : index
    %c0_61 = arith.constant 0 : index
    %c0_62 = arith.constant 0 : index
    %170 = vector.load %arg9[%c0_60, %c9, %c0_61, %c0_62] : memref<1x16x32x64xf32, #tpu.memory_space<vmem>>, vector<1x1x32x64xf32>
    %171 = vector.shape_cast %170 : vector<1x1x32x64xf32> to vector<32x64xf32>
    %172 = vector.shape_cast %103 : vector<32x64xf32> to vector<1x1x32x64xf32>
    tpu.vector_store %arg9[%c0_60, %c9, %c0_61, %c0_62], %172 {strides = array<i32>} : memref<1x16x32x64xf32, #tpu.memory_space<vmem>>, vector<1x1x32x64xf32>,
    %c0_63 = arith.constant 0 : index
    %c10 = arith.constant 10 : index
    %c0_64 = arith.constant 0 : index
    %c0_65 = arith.constant 0 : index
    %173 = vector.load %arg9[%c0_63, %c10, %c0_64, %c0_65] : memref<1x16x32x64xf32, #tpu.memory_space<vmem>>, vector<1x1x32x64xf32>
    %174 = vector.shape_cast %173 : vector<1x1x32x64xf32> to vector<32x64xf32>
    %175 = vector.shape_cast %103 : vector<32x64xf32> to vector<1x1x32x64xf32>
    tpu.vector_store %arg9[%c0_63, %c10, %c0_64, %c0_65], %175 {strides = array<i32>} : memref<1x16x32x64xf32, #tpu.memory_space<vmem>>, vector<1x1x32x64xf32>,
    %c0_66 = arith.constant 0 : index
    %c11 = arith.constant 11 : index
    %c0_67 = arith.constant 0 : index
    %c0_68 = arith.constant 0 : index
    %176 = vector.load %arg9[%c0_66, %c11, %c0_67, %c0_68] : memref<1x16x32x64xf32, #tpu.memory_space<vmem>>, vector<1x1x32x64xf32>
    %177 = vector.shape_cast %176 : vector<1x1x32x64xf32> to vector<32x64xf32>
    %178 = vector.shape_cast %103 : vector<32x64xf32> to vector<1x1x32x64xf32>
    tpu.vector_store %arg9[%c0_66, %c11, %c0_67, %c0_68], %178 {strides = array<i32>} : memref<1x16x32x64xf32, #tpu.memory_space<vmem>>, vector<1x1x32x64xf32>,
    %c0_69 = arith.constant 0 : index
    %c12 = arith.constant 12 : index
    %c0_70 = arith.constant 0 : index
    %c0_71 = arith.constant 0 : index
    %179 = vector.load %arg9[%c0_69, %c12, %c0_70, %c0_71] : memref<1x16x32x64xf32, #tpu.memory_space<vmem>>, vector<1x1x32x64xf32>
    %180 = vector.shape_cast %179 : vector<1x1x32x64xf32> to vector<32x64xf32>
    %181 = vector.shape_cast %103 : vector<32x64xf32> to vector<1x1x32x64xf32>
    tpu.vector_store %arg9[%c0_69, %c12, %c0_70, %c0_71], %181 {strides = array<i32>} : memref<1x16x32x64xf32, #tpu.memory_space<vmem>>, vector<1x1x32x64xf32>,
    %c0_72 = arith.constant 0 : index
    %c13 = arith.constant 13 : index
    %c0_73 = arith.constant 0 : index
    %c0_74 = arith.constant 0 : index
    %182 = vector.load %arg9[%c0_72, %c13, %c0_73, %c0_74] : memref<1x16x32x64xf32, #tpu.memory_space<vmem>>, vector<1x1x32x64xf32>
    %183 = vector.shape_cast %182 : vector<1x1x32x64xf32> to vector<32x64xf32>
    %184 = vector.shape_cast %103 : vector<32x64xf32> to vector<1x1x32x64xf32>
    tpu.vector_store %arg9[%c0_72, %c13, %c0_73, %c0_74], %184 {strides = array<i32>} : memref<1x16x32x64xf32, #tpu.memory_space<vmem>>, vector<1x1x32x64xf32>,
    %c0_75 = arith.constant 0 : index
    %c14 = arith.constant 14 : index
    %c0_76 = arith.constant 0 : index
    %c0_77 = arith.constant 0 : index
    %185 = vector.load %arg9[%c0_75, %c14, %c0_76, %c0_77] : memref<1x16x32x64xf32, #tpu.memory_space<vmem>>, vector<1x1x32x64xf32>
    %186 = vector.shape_cast %185 : vector<1x1x32x64xf32> to vector<32x64xf32>
    %187 = vector.shape_cast %103 : vector<32x64xf32> to vector<1x1x32x64xf32>
    tpu.vector_store %arg9[%c0_75, %c14, %c0_76, %c0_77], %187 {strides = array<i32>} : memref<1x16x32x64xf32, #tpu.memory_space<vmem>>, vector<1x1x32x64xf32>,
    %c0_78 = arith.constant 0 : index
    %c15 = arith.constant 15 : index
    %c0_79 = arith.constant 0 : index
    %c0_80 = arith.constant 0 : index
    %188 = vector.load %arg9[%c0_78, %c15, %c0_79, %c0_80] : memref<1x16x32x64xf32, #tpu.memory_space<vmem>>, vector<1x1x32x64xf32>
    %189 = vector.shape_cast %188 : vector<1x1x32x64xf32> to vector<32x64xf32>
    %190 = vector.shape_cast %142 : vector<32x64xf32> to vector<1x1x32x64xf32>
    tpu.vector_store %arg9[%c0_78, %c15, %c0_79, %c0_80], %190 {strides = array<i32>} : memref<1x16x32x64xf32, #tpu.memory_space<vmem>>, vector<1x1x32x64xf32>,
    return
  }
  func.func @transform_0(%arg0: i32, %arg1: i32) -> (i32, i32, i32, i32) {
    %c1_i32 = arith.constant 1 : i32
    %0 = arith.subi %arg1, %c1_i32 : i32
    %c0_i32 = arith.constant 0 : i32
    %1 = arith.maxsi %0, %c0_i32 : i32
    %c0_i32_0 = arith.constant 0 : i32
    %c0_i32_1 = arith.constant 0 : i32
    %c0_i32_2 = arith.constant 0 : i32
    return %arg0, %1, %c0_i32_0, %c0_i32_1 : i32, i32, i32, i32
  }
  func.func @transform_1(%arg0: i32, %arg1: i32) -> (i32, i32, i32, i32) {
    %c0_i32 = arith.constant 0 : i32
    %c0_i32_0 = arith.constant 0 : i32
    %c0_i32_1 = arith.constant 0 : i32
    return %arg0, %arg1, %c0_i32, %c0_i32_0 : i32, i32, i32, i32
  }
  func.func @transform_2(%arg0: i32, %arg1: i32) -> (i32, i32, i32, i32) {
    %c1_i32 = arith.constant 1 : i32
    %0 = arith.addi %arg1, %c1_i32 : i32
    %c1_i32_0 = arith.constant 1 : i32
    %1 = arith.minsi %0, %c1_i32_0 : i32
    %c0_i32 = arith.constant 0 : i32
    %c0_i32_1 = arith.constant 0 : i32
    %c0_i32_2 = arith.constant 0 : i32
    return %arg0, %1, %c0_i32, %c0_i32_1 : i32, i32, i32, i32
  }
  func.func @transform_3(%arg0: i32, %arg1: i32) -> (i32, i32) {
    %c0_i32 = arith.constant 0 : i32
    %c0_i32_0 = arith.constant 0 : i32
    %c0_i32_1 = arith.constant 0 : i32
    return %c0_i32, %c0_i32_0 : i32, i32
  }
  func.func @transform_4(%arg0: i32, %arg1: i32) -> (i32, i32) {
    %c0_i32 = arith.constant 0 : i32
    %c0_i32_0 = arith.constant 0 : i32
    %c0_i32_1 = arith.constant 0 : i32
    return %c0_i32, %c0_i32_0 : i32, i32
  }
  func.func @transform_5(%arg0: i32, %arg1: i32) -> (i32, i32) {
    %c0_i32 = arith.constant 0 : i32
    %c0_i32_0 = arith.constant 0 : i32
    %c0_i32_1 = arith.constant 0 : i32
    return %c0_i32, %c0_i32_0 : i32, i32
  }
  func.func @transform_6(%arg0: i32, %arg1: i32) -> (i32, i32) {
    %c0_i32 = arith.constant 0 : i32
    %c0_i32_0 = arith.constant 0 : i32
    %c0_i32_1 = arith.constant 0 : i32
    return %c0_i32, %c0_i32_0 : i32, i32
  }
  func.func @transform_7(%arg0: i32, %arg1: i32) -> (i32, i32, i32, i32) {
    %c0_i32 = arith.constant 0 : i32
    %c0_i32_0 = arith.constant 0 : i32
    %c0_i32_1 = arith.constant 0 : i32
    return %arg0, %arg1, %c0_i32, %c0_i32_0 : i32, i32, i32, i32
  }
}

</mosaic_0001>

<llo_original>
// kernel: pyramid_features_no_skip.1
$region0: #{pyramid_features_no_skip.1}
  #allocation0 [shape = 'u32[]', space=smem, size = 0x4, offset = 0x4, fixed_abs, tag = 'smem constant byte address 0x4 - core index']
  #allocation1 [shape = 'u32[144,128]{1,0:T(1,128)}', space=vmem, size = 0x12000, scoped, tag = 'internal scratch']
  %s0 = inlined_call_operand.vmem [shape: f32[2,2,2,32], index: 0, kind: input, shape index: {}, may-alias: {0,1,2}]
  %s1 = inlined_call_operand.vmem [shape: f32[2,2,2,32], index: 1, kind: input, shape index: {}, may-alias: {0,1,2}]
  %s2 = inlined_call_operand.vmem [shape: f32[2,2,2,32], index: 2, kind: input, shape index: {}, may-alias: {0,1,2}]
  %s3 = inlined_call_operand.vmem [shape: f32[32,128], index: 3, kind: input, shape index: {}]
  %s4 = inlined_call_operand.vmem [shape: f32[1,128], index: 4, kind: input, shape index: {}]
  %s5 = inlined_call_operand.vmem [shape: f32[384,576], index: 5, kind: input, shape index: {}]
  %s6 = inlined_call_operand.vmem [shape: f32[1,64], index: 6, kind: input, shape index: {}]
  %s7 = inlined_call_operand.hbm [shape: f32[2,32,32,64], index: 7, kind: output, shape index: {}]
  %s8 = sld [smem:[#allocation0]]
  $region61: #{pyramid_features_no_skip.1} parent=0
    _
  %s10 = ssub.s32 1, %s8
  %s11 = scalar_select 0, %s10, %s8
  $region1: #{pyramid_features_no_skip.1} parent=0
    #allocation2 [shape = 'u8[524288]{0}', space=vmem, size = 0x80000, scoped, tag = 'output window, operand 0']
    #allocation3 [shape = 's32[2]{0}', space=sflag, size = 0x8, scoped, tag = 'scoped memory for pyramid_features_no_skip.1']
    %12 = vsyncpa [#allocation3], 0
    %s13 = scalar_lea.sflag [#allocation3], 1
    %14 = vsyncpa %s13, 0
    loop: start=0, step=1, limit=6
    $region2: #{pyramid_features_no_skip.1} parent=1 // loop_pre_header
      _
    $region3: #{pyramid_features_no_skip.1} parent=1 // loop_header
      %s16 = sphi 0, %s20
      %p17 = scmp.ge.s32.totalorder %s16, 6
      %s23 = sphi 0, %s35
      %s24 = sphi 0, %s31
      %s25 = sphi 0, %s23
      %s26 = sphi 0, %s24
      %s27 = sphi 0, %s25
      %s28 = sphi 0, %s26
      %s46 = sphi 0, %s48
      %s49 = sphi 0, %s46
      %s50 = sphi 0, %s49
      %s66 = sphi 0, %s50
      %s74 = sphi 0, %s76
      %s77 = sphi 0, %s74
      %s78 = sphi 0, %s77
      %s94 = sphi 0, %s78
      %s108 = sphi 0, %s110
      %s111 = sphi 0, %s108
      %s112 = sphi 0, %s111
      %s128 = sphi 0, %s112
      %s132 = sphi 0, %s132
      %s134 = sphi 0, %s132
      %s135 = sphi 0, %s134
      %s149 = sphi 0, %s135
      %s153 = sphi 0, %s153
      %s155 = sphi 0, %s153
      %s156 = sphi 0, %s155
      %s170 = sphi 0, %s156
      %s174 = sphi 0, %s174
      %s176 = sphi 0, %s174
      %s177 = sphi 0, %s176
      %s191 = sphi 0, %s177
      %s195 = sphi 0, %s195
      %s197 = sphi 0, %s195
      %s198 = sphi 0, %s197
      %s212 = sphi 0, %s198
      %s220 = sphi 0, %s222
      %s223 = sphi 0, %s220
      %s224 = sphi 0, %s223
      %s240 = sphi 0, %s224
    $region4: #{pyramid_features_no_skip.1} parent=1 // loop_header_branch
      %19 = sbr.rel (%p17) target = $region8
    $region5: #{pyramid_features_no_skip.1} parent=1 // loop_body
      %s21 = ssub.s32 %s16, 1
      %s22 = ssub.s32 %s16, 2
      %s29 = sadd.s32 1, %s24
      %p30 = scmp.ge.s32.totalorder %s29, 2
      %s31 = scalar_select %p30, 0, %s29
      %s32 = sadd.s32 1, %s23
      %s33 = scalar_select %p30, %s32, %s23
      %p34 = scmp.ge.s32.totalorder %s33, 2
      %s35 = scalar_select %p34, 0, %s33
      %s36 = ssub.s32 %s24, 1
      %p37 = scmp.gt.s32.totalorder %s36, 0
      %s38 = scalar_select %p37, %s36, 0
      %s39 = ssub.s32 %s31, 1
      %p40 = scmp.gt.s32.totalorder %s39, 0
      %s41 = scalar_select %p40, %s39, 0
      %s42 = ssub.s32 %s23, %s35
      %s43 = ssub.s32 %s38, %s41
      %s44 = sor.u32 %s42, %s43
      %p45 = scmp.eq.s32.totalorder %s44, 0
      %s47 = sadd.s32 %s46, 1
      %s48 = scalar_select %p45, %s46, %s47
      %p51 = pneg %p45
      %p52 = scmp.eq.s32.totalorder %s16, 3
      %p53 = por %p51, %p52
      %p54 = scmp.ne.s32.totalorder %s46, %s49
      %p55 = scmp.eq.s32.totalorder %s16, 0
      %p56 = por %p54, %p55
      %p57 = scmp.ne.s32.totalorder %s46, %s49
      %p58 = scmp.eq.s32.totalorder %s21, 3
      %p59 = por %p57, %p58
      %p60 = scmp.ne.s32.totalorder %s49, %s50
      %p61 = scmp.eq.s32.totalorder %s21, 0
      %p62 = por %p60, %p61
      %p63 = scmp.ne.s32.totalorder %s49, %s50
      %p64 = scmp.eq.s32.totalorder %s22, 3
      %p65 = por %p63, %p64
      %p67 = scmp.ne.s32.totalorder %s50, %s66
      %p68 = scmp.eq.s32.totalorder %s22, 0
      %p69 = por %p67, %p68
      %s70 = ssub.s32 %s23, %s35
      %s71 = ssub.s32 %s24, %s31
      %s72 = sor.u32 %s70, %s71
      %p73 = scmp.eq.s32.totalorder %s72, 0
      %s75 = sadd.s32 %s74, 1
      %s76 = scalar_select %p73, %s74, %s75
      %p79 = pneg %p73
      %p80 = scmp.eq.s32.totalorder %s16, 3
      %p81 = por %p79, %p80
      %p82 = scmp.ne.s32.totalorder %s74, %s77
      %p83 = scmp.eq.s32.totalorder %s16, 0
      %p84 = por %p82, %p83
      %p85 = scmp.ne.s32.totalorder %s74, %s77
      %p86 = scmp.eq.s32.totalorder %s21, 3
      %p87 = por %p85, %p86
      %p88 = scmp.ne.s32.totalorder %s77, %s78
      %p89 = scmp.eq.s32.totalorder %s21, 0
      %p90 = por %p88, %p89
      %p91 = scmp.ne.s32.totalorder %s77, %s78
      %p92 = scmp.eq.s32.totalorder %s22, 3
      %p93 = por %p91, %p92
      %p95 = scmp.ne.s32.totalorder %s78, %s94
      %p96 = scmp.eq.s32.totalorder %s22, 0
      %p97 = por %p95, %p96
      %s98 = sadd.s32 %s24, 1
      %p99 = scmp.lt.s32.totalorder %s98, 1
      %s100 = scalar_select %p99, %s98, 1
      %s101 = sadd.s32 %s31, 1
      %p102 = scmp.lt.s32.totalorder %s101, 1
      %s103 = scalar_select %p102, %s101, 1
      %s104 = ssub.s32 %s23, %s35
      %s105 = ssub.s32 %s100, %s103
      %s106 = sor.u32 %s104, %s105
      %p107 = scmp.eq.s32.totalorder %s106, 0
      %s109 = sadd.s32 %s108, 1
      %s110 = scalar_select %p107, %s108, %s109
      %p113 = pneg %p107
      %p114 = scmp.eq.s32.totalorder %s16, 3
      %p115 = por %p113, %p114
      %p116 = scmp.ne.s32.totalorder %s108, %s111
      %p117 = scmp.eq.s32.totalorder %s16, 0
      %p118 = por %p116, %p117
      %p119 = scmp.ne.s32.totalorder %s108, %s111
      %p120 = scmp.eq.s32.totalorder %s21, 3
      %p121 = por %p119, %p120
      %p122 = scmp.ne.s32.totalorder %s111, %s112
      %p123 = scmp.eq.s32.totalorder %s21, 0
      %p124 = por %p122, %p123
      %p125 = scmp.ne.s32.totalorder %s111, %s112
      %p126 = scmp.eq.s32.totalorder %s22, 3
      %p127 = por %p125, %p126
      %p129 = scmp.ne.s32.totalorder %s112, %s128
      %p130 = scmp.eq.s32.totalorder %s22, 0
      %p131 = por %p129, %p130
      %s133 = sadd.s32 %s132, 1
      %p136 = scmp.eq.s32.totalorder %s16, 3
      %p137 = scmp.ne.s32.totalorder %s132, %s134
      %p138 = scmp.eq.s32.totalorder %s16, 0
      %p139 = por %p137, %p138
      %p140 = scmp.ne.s32.totalorder %s132, %s134
      %p141 = scmp.eq.s32.totalorder %s21, 3
      %p142 = por %p140, %p141
      %p143 = scmp.ne.s32.totalorder %s134, %s135
      %p144 = scmp.eq.s32.totalorder %s21, 0
      %p145 = por %p143, %p144
      %p146 = scmp.ne.s32.totalorder %s134, %s135
      %p147 = scmp.eq.s32.totalorder %s22, 3
      %p148 = por %p146, %p147
      %p150 = scmp.ne.s32.totalorder %s135, %s149
      %p151 = scmp.eq.s32.totalorder %s22, 0
      %p152 = por %p150, %p151
      %s154 = sadd.s32 %s153, 1
      %p157 = scmp.eq.s32.totalorder %s16, 3
      %p158 = scmp.ne.s32.totalorder %s153, %s155
      %p159 = scmp.eq.s32.totalorder %s16, 0
      %p160 = por %p158, %p159
      %p161 = scmp.ne.s32.totalorder %s153, %s155
      %p162 = scmp.eq.s32.totalorder %s21, 3
      %p163 = por %p161, %p162
      %p164 = scmp.ne.s32.totalorder %s155, %s156
      %p165 = scmp.eq.s32.totalorder %s21, 0
      %p166 = por %p164, %p165
      %p167 = scmp.ne.s32.totalorder %s155, %s156
      %p168 = scmp.eq.s32.totalorder %s22, 3
      %p169 = por %p167, %p168
      %p171 = scmp.ne.s32.totalorder %s156, %s170
      %p172 = scmp.eq.s32.totalorder %s22, 0
      %p173 = por %p171, %p172
      %s175 = sadd.s32 %s174, 1
      %p178 = scmp.eq.s32.totalorder %s16, 3
      %p179 = scmp.ne.s32.totalorder %s174, %s176
      %p180 = scmp.eq.s32.totalorder %s16, 0
      %p181 = por %p179, %p180
      %p182 = scmp.ne.s32.totalorder %s174, %s176
      %p183 = scmp.eq.s32.totalorder %s21, 3
      %p184 = por %p182, %p183
      %p185 = scmp.ne.s32.totalorder %s176, %s177
      %p186 = scmp.eq.s32.totalorder %s21, 0
      %p187 = por %p185, %p186
      %p188 = scmp.ne.s32.totalorder %s176, %s177
      %p189 = scmp.eq.s32.totalorder %s22, 3
      %p190 = por %p188, %p189
      %p192 = scmp.ne.s32.totalorder %s177, %s191
      %p193 = scmp.eq.s32.totalorder %s22, 0
      %p194 = por %p192, %p193
      %s196 = sadd.s32 %s195, 1
      %p199 = scmp.eq.s32.totalorder %s16, 3
      %p200 = scmp.ne.s32.totalorder %s195, %s197
      %p201 = scmp.eq.s32.totalorder %s16, 0
      %p202 = por %p200, %p201
      %p203 = scmp.ne.s32.totalorder %s195, %s197
      %p204 = scmp.eq.s32.totalorder %s21, 3
      %p205 = por %p203, %p204
      %p206 = scmp.ne.s32.totalorder %s197, %s198
      %p207 = scmp.eq.s32.totalorder %s21, 0
      %p208 = por %p206, %p207
      %p209 = scmp.ne.s32.totalorder %s197, %s198
      %p210 = scmp.eq.s32.totalorder %s22, 3
      %p211 = por %p209, %p210
      %p213 = scmp.ne.s32.totalorder %s198, %s212
      %p214 = scmp.eq.s32.totalorder %s22, 0
      %p215 = por %p213, %p214
      %s216 = ssub.s32 %s23, %s35
      %s217 = ssub.s32 %s24, %s31
      %s218 = sor.u32 %s216, %s217
      %p219 = scmp.eq.s32.totalorder %s218, 0
      %s221 = sadd.s32 %s220, 1
      %s222 = scalar_select %p219, %s220, %s221
      %p225 = pneg %p219
      %p226 = scmp.eq.s32.totalorder %s16, 3
      %p227 = por %p225, %p226
      %p228 = scmp.ne.s32.totalorder %s220, %s223
      %p229 = scmp.eq.s32.totalorder %s16, 0
      %p230 = por %p228, %p229
      %p231 = scmp.ne.s32.totalorder %s220, %s223
      %p232 = scmp.eq.s32.totalorder %s21, 3
      %p233 = por %p231, %p232
      %p234 = scmp.ne.s32.totalorder %s223, %s224
      %p235 = scmp.eq.s32.totalorder %s21, 0
      %p236 = por %p234, %p235
      %p237 = scmp.ne.s32.totalorder %s223, %s224
      %p238 = scmp.eq.s32.totalorder %s22, 3
      %p239 = por %p237, %p238
      %p241 = scmp.ne.s32.totalorder %s224, %s240
      %p242 = scmp.eq.s32.totalorder %s22, 0
      %p243 = por %p241, %p242
      %p244 = scmp.le.s32.totalorder 1, %s16
      %p245 = scmp.lt.s32.totalorder %s16, 5
      %p246 = pnand %p244, %p245
      %p247 = pneg %p246
      // Predicated region
      $region9: #{pyramid_features_no_skip.1} parent=5 // pred_check
        _
      $region10: #{pyramid_features_no_skip.1} parent=5 // pred_check_branch
        %249 = sbr.rel (%p246) target = $region12
      $region11: #{pyramid_features_no_skip.1} parent=5 // pred_region
        %s250 = ssub.s32 %s16, 1
        // Predicated region
        $region13: #{pyramid_features_no_skip.1} parent=11 // pred_check
          %p251 = pneg %p145
        $region14: #{pyramid_features_no_skip.1} parent=11 // pred_check_branch
          %253 = sbr.rel (%p251) target = $region16
        $region15: #{pyramid_features_no_skip.1} parent=11 // pred_region
          _
        $region16: #{pyramid_features_no_skip.1} parent=11 // pred_fallthru
          _
        // Predicated region
        $region17: #{pyramid_features_no_skip.1} parent=11 // pred_check
          %p254 = pneg %p166
        $region18: #{pyramid_features_no_skip.1} parent=11 // pred_check_branch
          %256 = sbr.rel (%p254) target = $region20
        $region19: #{pyramid_features_no_skip.1} parent=11 // pred_region
          _
        $region20: #{pyramid_features_no_skip.1} parent=11 // pred_fallthru
          _
        // Predicated region
        $region21: #{pyramid_features_no_skip.1} parent=11 // pred_check
          %p257 = pneg %p187
        $region22: #{pyramid_features_no_skip.1} parent=11 // pred_check_branch
          %259 = sbr.rel (%p257) target = $region24
        $region23: #{pyramid_features_no_skip.1} parent=11 // pred_region
          _
        $region24: #{pyramid_features_no_skip.1} parent=11 // pred_fallthru
          _
        // Predicated region
        $region25: #{pyramid_features_no_skip.1} parent=11 // pred_check
          %p260 = pneg %p208
        $region26: #{pyramid_features_no_skip.1} parent=11 // pred_check_branch
          %262 = sbr.rel (%p260) target = $region28
        $region27: #{pyramid_features_no_skip.1} parent=11 // pred_region
          _
        $region28: #{pyramid_features_no_skip.1} parent=11 // pred_fallthru
          _
      $region12: #{pyramid_features_no_skip.1} parent=5 // pred_fallthru
        _
      %p263 = scmp.lt.s32.totalorder %s16, 4
      // Predicated region
      $region29: #{pyramid_features_no_skip.1} parent=5 // pred_check
        %p264 = pneg %p263
      $region30: #{pyramid_features_no_skip.1} parent=5 // pred_check_branch
        %266 = sbr.rel (%p264) target = $region32
      $region31: #{pyramid_features_no_skip.1} parent=5 // pred_region
        // Predicated region
        $region33: #{pyramid_features_no_skip.1} parent=31 // pred_check
          %p267 = pneg %p56
        $region34: #{pyramid_features_no_skip.1} parent=31 // pred_check_branch
          %269 = sbr.rel (%p267) target = $region36
        $region35: #{pyramid_features_no_skip.1} parent=31 // pred_region
          %s270 = ssub.s32 %s24, 1
          %p271 = scmp.gt.s32.totalorder %s270, 0
          %s272 = scalar_select %p271, %s270, 0
          %p273 = scmp.lt.s32.totalorder %s23, 1
          %s274 = scalar_select %p273, %s23, 1
          %p275 = scmp.lt.s32.totalorder %s272, 1
          %s276 = scalar_select %p275, %s272, 1
          %s277 = smul.addr %s274, 2
          %s278 = sadd.s32 %s276, %s277
          %s279 = smul.addr %s278, 2
          %s280 = scalar_lea.vmem %s0, %s279
          %s281 = ssub.s32 %s24, 1
          %p282 = scmp.gt.s32.totalorder %s281, 0
          %s283 = scalar_select %p282, %s281, 0
        $region36: #{pyramid_features_no_skip.1} parent=31 // pred_fallthru
          _
        // Predicated region
        $region37: #{pyramid_features_no_skip.1} parent=31 // pred_check
          %p284 = pneg %p84
        $region38: #{pyramid_features_no_skip.1} parent=31 // pred_check_branch
          %286 = sbr.rel (%p284) target = $region40
        $region39: #{pyramid_features_no_skip.1} parent=31 // pred_region
          %p287 = scmp.lt.s32.totalorder %s23, 1
          %s288 = scalar_select %p287, %s23, 1
          %p289 = scmp.lt.s32.totalorder %s24, 1
          %s290 = scalar_select %p289, %s24, 1
          %s291 = smul.addr %s288, 2
          %s292 = sadd.s32 %s290, %s291
          %s293 = smul.addr %s292, 2
          %s294 = scalar_lea.vmem %s1, %s293
        $region40: #{pyramid_features_no_skip.1} parent=31 // pred_fallthru
          _
        // Predicated region
        $region41: #{pyramid_features_no_skip.1} parent=31 // pred_check
          %p295 = pneg %p118
        $region42: #{pyramid_features_no_skip.1} parent=31 // pred_check_branch
          %297 = sbr.rel (%p295) target = $region44
        $region43: #{pyramid_features_no_skip.1} parent=31 // pred_region
          %s298 = sadd.s32 %s24, 1
          %p299 = scmp.lt.s32.totalorder %s298, 1
          %s300 = scalar_select %p299, %s298, 1
          %p301 = scmp.lt.s32.totalorder %s23, 1
          %s302 = scalar_select %p301, %s23, 1
          %p303 = scmp.lt.s32.totalorder %s300, 1
          %s304 = scalar_select %p303, %s300, 1
          %s305 = smul.addr %s302, 2
          %s306 = sadd.s32 %s304, %s305
          %s307 = smul.addr %s306, 2
          %s308 = scalar_lea.vmem %s2, %s307
          %s309 = sadd.s32 %s24, 1
          %p310 = scmp.lt.s32.totalorder %s309, 1
          %s311 = scalar_select %p310, %s309, 1
        $region44: #{pyramid_features_no_skip.1} parent=31 // pred_fallthru
          _
      $region32: #{pyramid_features_no_skip.1} parent=5 // pred_fallthru
        _
      %p312 = scmp.le.s32.totalorder 1, %s16
      %p313 = scmp.lt.s32.totalorder %s16, 5
      %p314 = pnand %p312, %p313
      %p315 = pneg %p314
      // Predicated region
      $region45: #{pyramid_features_no_skip.1} parent=5 // pred_check
        _
      $region46: #{pyramid_features_no_skip.1} parent=5 // pred_check_branch
        %317 = sbr.rel (%p314) target = $region48
      $region47: #{pyramid_features_no_skip.1} parent=5 // pred_region
        %s318 = ssub.s32 %s16, 1
        %s319 = ssub.s32 %s26, 1
        %p320 = scmp.gt.s32.totalorder %s319, 0
        %s321 = scalar_select %p320, %s319, 0
        %p322 = scmp.lt.s32.totalorder %s25, 1
        %s323 = scalar_select %p322, %s25, 1
        %p324 = scmp.lt.s32.totalorder %s321, 1
        %s325 = scalar_select %p324, %s321, 1
        %s326 = smul.addr %s323, 2
        %s327 = sadd.s32 %s325, %s326
        %s328 = smul.addr %s327, 2
        %s329 = scalar_lea.vmem %s0, %s328
        %p330 = pneg %p62
        %p331 = pneg %p59
        %p332 = scmp.lt.s32.totalorder %s25, 1
        %s333 = scalar_select %p332, %s25, 1
        %p334 = scmp.lt.s32.totalorder %s26, 1
        %s335 = scalar_select %p334, %s26, 1
        %s336 = smul.addr %s333, 2
        %s337 = sadd.s32 %s335, %s336
        %s338 = smul.addr %s337, 2
        %s339 = scalar_lea.vmem %s1, %s338
        %p340 = pneg %p90
        %p341 = pneg %p87
        %s342 = sadd.s32 %s26, 1
        %p343 = scmp.lt.s32.totalorder %s342, 1
        %s344 = scalar_select %p343, %s342, 1
        %p345 = scmp.lt.s32.totalorder %s25, 1
        %s346 = scalar_select %p345, %s25, 1
        %p347 = scmp.lt.s32.totalorder %s344, 1
        %s348 = scalar_select %p347, %s344, 1
        %s349 = smul.addr %s346, 2
        %s350 = sadd.s32 %s348, %s349
        %s351 = smul.addr %s350, 2
        %s352 = scalar_lea.vmem %s2, %s351
        %p353 = pneg %p124
        %p354 = pneg %p121
        %p355 = pneg %p145
        %p356 = pneg %p142
        %p357 = pneg %p166
        %p358 = pneg %p163
        %p359 = pneg %p187
        %p360 = pneg %p184
        %p361 = pneg %p208
        %p362 = pneg %p205
        %p363 = pneg %p236
        %p364 = pneg %p233
        %s365 = sand.u32 %s223, 1
        %s366 = scalar_lea.sflag [#allocation3], %s365
        %s367 = sand.u32 %s223, 1
        %s368 = smul.addr %s367, 512
        %s369 = scalar_lea.vmem [#allocation2], %s368
        %s370 = ssub.s32 %s26, 1
        %p371 = scmp.gt.s32.totalorder %s370, 0
        %s372 = scalar_select %p371, %s370, 0
        %p373 = scmp.lt.s32.totalorder %s25, 1
        %s374 = scalar_select %p373, %s25, 1
        %p375 = scmp.lt.s32.totalorder %s372, 1
        %s376 = scalar_select %p375, %s372, 1
        %s377 = smul.addr %s374, 2
        %s378 = sadd.s32 %s376, %s377
        %s379 = smul.addr %s378, 2
        %s380 = scalar_lea.vmem %s0, %s379
        %s381 = ssub.s32 %s26, 1
        %p382 = scmp.gt.s32.totalorder %s381, 0
        %s383 = scalar_select %p382, %s381, 0
        %p384 = scmp.lt.s32.totalorder %s25, 1
        %s385 = scalar_select %p384, %s25, 1
        %p386 = scmp.lt.s32.totalorder %s26, 1
        %s387 = scalar_select %p386, %s26, 1
        %s388 = smul.addr %s385, 2
        %s389 = sadd.s32 %s387, %s388
        %s390 = smul.addr %s389, 2
        %s391 = scalar_lea.vmem %s1, %s390
        %s392 = sadd.s32 %s26, 1
        %p393 = scmp.lt.s32.totalorder %s392, 1
        %s394 = scalar_select %p393, %s392, 1
        %p395 = scmp.lt.s32.totalorder %s25, 1
        %s396 = scalar_select %p395, %s25, 1
        %p397 = scmp.lt.s32.totalorder %s394, 1
        %s398 = scalar_select %p397, %s394, 1
        %s399 = smul.addr %s396, 2
        %s400 = sadd.s32 %s398, %s399
        %s401 = smul.addr %s400, 2
        %s402 = scalar_lea.vmem %s2, %s401
        %s403 = sadd.s32 %s26, 1
        %p404 = scmp.lt.s32.totalorder %s403, 1
        %s405 = scalar_select %p404, %s403, 1
        %s406 = smul.u32 16, %s26
        %v407 = vld [vmem:[%s4] sm:$0x1]
        %v408 = vld [vmem:[%s380] sm:$0x3]
        %v409 = vld [vmem:[%s3] sm:$0xff]
        %v410 = vld [vmem:[%s3 + $0x8] sm:$0xff]
        %v411 = vld [vmem:[%s3 + $0x10] sm:$0xff]
        %v412 = vld [vmem:[%s3 + $0x18] sm:$0xff]
        %v414 = vlaneseq
        %v415 = vshrl.u32 %v414, 7
        %v416 = vsub.s32 0, %v415
        %v417 = vrot.slane %v407, %v416
        %vm419 = vcmask 261120
        %v421 = vsel %vm419, %v408, 0
        %423 = vmatprep.subr.mxu0 0.0
        %424 = vmatpush1.msra.mxu0 0.0
        %425 = vmatprep.subr.mxu0 0.0
        %426 = vmatpush1.msra.mxu0 0.0
        %427 = vmatprep.subr.mxu0 0.0
        %428 = vmatpush1.msra.mxu0 0.0
        %429 = vmatprep.subr.mxu0 0.0
        %430 = vmatpush1.msra.mxu0 0.0
        %431 = vmatprep.subr.mxu0 0.0
        %432 = vmatpush1.msra.mxu0 0.0
        %433 = vmatprep.subr.mxu0 0.0
        %434 = vmatpush1.msra.mxu0 0.0
        %435 = vmatprep.subr.mxu0 0.0
        %436 = vmatpush1.msra.mxu0 0.0
        %437 = vmatprep.subr.mxu0 0.0
        %438 = vmatpush1.msra.mxu0 0.0
        %439 = vmatprep.subr.mxu0 0.0
        %440 = vmatpush1.msra.mxu0 0.0
        %441 = vmatprep.subr.mxu0 0.0
        %442 = vmatpush1.msra.mxu0 0.0
        %443 = vmatprep.subr.mxu0 0.0
        %444 = vmatpush1.msra.mxu0 0.0
        %445 = vmatprep.subr.mxu0 0.0
        %446 = vmatpush1.msra.mxu0 0.0
        %447 = vmatprep.subr.mxu0 0.0
        %448 = vmatpush1.msra.mxu0 %v412
        %449 = vmatprep.subr.mxu0 0.0
        %450 = vmatpush1.msra.mxu0 %v411
        %451 = vmatprep.subr.mxu0 0.0
        %452 = vmatpush1.msra.mxu0 %v410
        %453 = vmatprep.subr.mxu0 0.0
        %454 = vmatpush1.msra.mxu0 %v409
        %455 = vmatprep.subr.mxu0 0.0
        %456 = vmatpush2.msra.mxu0 0.0
        %457 = vmatprep.subr.mxu0 0.0
        %458 = vmatpush2.msra.mxu0 0.0
        %459 = vmatprep.subr.mxu0 0.0
        %460 = vmatpush2.msra.mxu0 0.0
        %461 = vmatprep.subr.mxu0 0.0
        %462 = vmatpush2.msra.mxu0 0.0
        %463 = vmatprep.subr.mxu0 0.0
        %464 = vmatpush2.msra.mxu0 0.0
        %465 = vmatprep.subr.mxu0 0.0
        %466 = vmatpush2.msra.mxu0 0.0
        %467 = vmatprep.subr.mxu0 0.0
        %468 = vmatpush2.msra.mxu0 0.0
        %469 = vmatprep.subr.mxu0 0.0
        %470 = vmatpush2.msra.mxu0 0.0
        %471 = vmatprep.subr.mxu0 0.0
        %472 = vmatpush2.msra.mxu0 0.0
        %473 = vmatprep.subr.mxu0 0.0
        %474 = vmatpush2.msra.mxu0 0.0
        %475 = vmatprep.subr.mxu0 0.0
        %476 = vmatpush2.msra.mxu0 0.0
        %477 = vmatprep.subr.mxu0 0.0
        %478 = vmatpush2.msra.mxu0 0.0
        %479 = vmatprep.subr.mxu0 0.0
        %480 = vmatpush2.msra.mxu0 0.0
        %481 = vmatprep.subr.mxu0 0.0
        %482 = vmatpush2.msra.mxu0 0.0
        %483 = vmatprep.subr.mxu0 0.0
        %484 = vmatpush2.msra.mxu0 0.0
        %485 = vmatprep.subr.mxu0 0.0
        %486 = vmatpush2.msra.mxu0 0.0
        %487 = vmatprep.mubr.f32.mxu0 0.0
        %488 = vmatmul.mubr.f32.gmra.mxu0 %v421
        %v489 = vpop.f32.mrf.mxu0
        %v490 = vadd.f32 %v417, %v489
        %v491 = vpop.f32.mrf.mxu0
        %492 = vdwg.mxu0
        %v493 = vld [vmem:[%s391] sm:$0x3]
        %v495 = vsel %vm419, %v493, 0
        %497 = vmatprep.subr.mxu0 0.0
        %498 = vmatpush1.msra.mxu0 0.0
        %499 = vmatprep.subr.mxu0 0.0
        %500 = vmatpush1.msra.mxu0 0.0
        %501 = vmatprep.subr.mxu0 0.0
        %502 = vmatpush1.msra.mxu0 0.0
        %503 = vmatprep.subr.mxu0 0.0
        %504 = vmatpush1.msra.mxu0 0.0
        %505 = vmatprep.subr.mxu0 0.0
        %506 = vmatpush1.msra.mxu0 0.0
        %507 = vmatprep.subr.mxu0 0.0
        %508 = vmatpush1.msra.mxu0 0.0
        %509 = vmatprep.subr.mxu0 0.0
        %510 = vmatpush1.msra.mxu0 0.0
        %511 = vmatprep.subr.mxu0 0.0
        %512 = vmatpush1.msra.mxu0 0.0
        %513 = vmatprep.subr.mxu0 0.0
        %514 = vmatpush1.msra.mxu0 0.0
        %515 = vmatprep.subr.mxu0 0.0
        %516 = vmatpush1.msra.mxu0 0.0
        %517 = vmatprep.subr.mxu0 0.0
        %518 = vmatpush1.msra.mxu0 0.0
        %519 = vmatprep.subr.mxu0 0.0
        %520 = vmatpush1.msra.mxu0 0.0
        %521 = vmatprep.subr.mxu0 0.0
        %522 = vmatpush1.msra.mxu0 %v412
        %523 = vmatprep.subr.mxu0 0.0
        %524 = vmatpush1.msra.mxu0 %v411
        %525 = vmatprep.subr.mxu0 0.0
        %526 = vmatpush1.msra.mxu0 %v410
        %527 = vmatprep.subr.mxu0 0.0
        %528 = vmatpush1.msra.mxu0 %v409
        %529 = vmatprep.subr.mxu0 0.0
        %530 = vmatpush2.msra.mxu0 0.0
        %531 = vmatprep.subr.mxu0 0.0
        %532 = vmatpush2.msra.mxu0 0.0
        %533 = vmatprep.subr.mxu0 0.0
        %534 = vmatpush2.msra.mxu0 0.0
        %535 = vmatprep.subr.mxu0 0.0
        %536 = vmatpush2.msra.mxu0 0.0
        %537 = vmatprep.subr.mxu0 0.0
        %538 = vmatpush2.msra.mxu0 0.0
        %539 = vmatprep.subr.mxu0 0.0
        %540 = vmatpush2.msra.mxu0 0.0
        %541 = vmatprep.subr.mxu0 0.0
        %542 = vmatpush2.msra.mxu0 0.0
        %543 = vmatprep.subr.mxu0 0.0
        %544 = vmatpush2.msra.mxu0 0.0
        %545 = vmatprep.subr.mxu0 0.0
        %546 = vmatpush2.msra.mxu0 0.0
        %547 = vmatprep.subr.mxu0 0.0
        %548 = vmatpush2.msra.mxu0 0.0
        %549 = vmatprep.subr.mxu0 0.0
        %550 = vmatpush2.msra.mxu0 0.0
        %551 = vmatprep.subr.mxu0 0.0
        %552 = vmatpush2.msra.mxu0 0.0
        %553 = vmatprep.subr.mxu0 0.0
        %554 = vmatpush2.msra.mxu0 0.0
        %555 = vmatprep.subr.mxu0 0.0
        %556 = vmatpush2.msra.mxu0 0.0
        %557 = vmatprep.subr.mxu0 0.0
        %558 = vmatpush2.msra.mxu0 0.0
        %559 = vmatprep.subr.mxu0 0.0
        %560 = vmatpush2.msra.mxu0 0.0
        %561 = vmatprep.mubr.f32.mxu0 0.0
        %562 = vmatmul.mubr.f32.gmra.mxu0 %v495
        %v563 = vpop.f32.mrf.mxu0
        %v564 = vadd.f32 %v417, %v563
        %v565 = vpop.f32.mrf.mxu0
        %566 = vdwg.mxu0
        %v567 = vld [vmem:[%s402] sm:$0x3]
        %v569 = vsel %vm419, %v567, 0
        %571 = vmatprep.subr.mxu0 0.0
        %572 = vmatpush1.msra.mxu0 0.0
        %573 = vmatprep.subr.mxu0 0.0
        %574 = vmatpush1.msra.mxu0 0.0
        %575 = vmatprep.subr.mxu0 0.0
        %576 = vmatpush1.msra.mxu0 0.0
        %577 = vmatprep.subr.mxu0 0.0
        %578 = vmatpush1.msra.mxu0 0.0
        %579 = vmatprep.subr.mxu0 0.0
        %580 = vmatpush1.msra.mxu0 0.0
        %581 = vmatprep.subr.mxu0 0.0
        %582 = vmatpush1.msra.mxu0 0.0
        %583 = vmatprep.subr.mxu0 0.0
        %584 = vmatpush1.msra.mxu0 0.0
        %585 = vmatprep.subr.mxu0 0.0
        %586 = vmatpush1.msra.mxu0 0.0
        %587 = vmatprep.subr.mxu0 0.0
        %588 = vmatpush1.msra.mxu0 0.0
        %589 = vmatprep.subr.mxu0 0.0
        %590 = vmatpush1.msra.mxu0 0.0
        %591 = vmatprep.subr.mxu0 0.0
        %592 = vmatpush1.msra.mxu0 0.0
        %593 = vmatprep.subr.mxu0 0.0
        %594 = vmatpush1.msra.mxu0 0.0
        %595 = vmatprep.subr.mxu0 0.0
        %596 = vmatpush1.msra.mxu0 %v412
        %597 = vmatprep.subr.mxu0 0.0
        %598 = vmatpush1.msra.mxu0 %v411
        %599 = vmatprep.subr.mxu0 0.0
        %600 = vmatpush1.msra.mxu0 %v410
        %601 = vmatprep.subr.mxu0 0.0
        %602 = vmatpush1.msra.mxu0 %v409
        %603 = vmatprep.subr.mxu0 0.0
        %604 = vmatpush2.msra.mxu0 0.0
        %605 = vmatprep.subr.mxu0 0.0
        %606 = vmatpush2.msra.mxu0 0.0
        %607 = vmatprep.subr.mxu0 0.0
        %608 = vmatpush2.msra.mxu0 0.0
        %609 = vmatprep.subr.mxu0 0.0
        %610 = vmatpush2.msra.mxu0 0.0
        %611 = vmatprep.subr.mxu0 0.0
        %612 = vmatpush2.msra.mxu0 0.0
        %613 = vmatprep.subr.mxu0 0.0
        %614 = vmatpush2.msra.mxu0 0.0
        %615 = vmatprep.subr.mxu0 0.0
        %616 = vmatpush2.msra.mxu0 0.0
        %617 = vmatprep.subr.mxu0 0.0
        %618 = vmatpush2.msra.mxu0 0.0
        %619 = vmatprep.subr.mxu0 0.0
        %620 = vmatpush2.msra.mxu0 0.0
        %621 = vmatprep.subr.mxu0 0.0
        %622 = vmatpush2.msra.mxu0 0.0
        %623 = vmatprep.subr.mxu0 0.0
        %624 = vmatpush2.msra.mxu0 0.0
        %625 = vmatprep.subr.mxu0 0.0
        %626 = vmatpush2.msra.mxu0 0.0
        %627 = vmatprep.subr.mxu0 0.0
        %628 = vmatpush2.msra.mxu0 0.0
        %629 = vmatprep.subr.mxu0 0.0
        %630 = vmatpush2.msra.mxu0 0.0
        %631 = vmatprep.subr.mxu0 0.0
        %632 = vmatpush2.msra.mxu0 0.0
        %633 = vmatprep.subr.mxu0 0.0
        %634 = vmatpush2.msra.mxu0 0.0
        %635 = vmatprep.mubr.f32.mxu0 0.0
        %636 = vmatmul.mubr.f32.gmra.mxu0 %v569
        %v637 = vpop.f32.mrf.mxu0
        %v638 = vadd.f32 %v417, %v637
        %v639 = vpop.f32.mrf.mxu0
        %640 = vdwg.mxu0
        %v641 = vld [vmem:[%s5] sm:$0xff]
        %v642 = vld [vmem:[%s5 + $0x8] sm:$0xff]
        %v643 = vld [vmem:[%s5 + $0x10] sm:$0xff]
        %v644 = vld [vmem:[%s5 + $0x18] sm:$0xff]
        %v645 = vld [vmem:[%s5 + $0x20] sm:$0xff]
        %v646 = vld [vmem:[%s5 + $0x28] sm:$0xff]
        %v647 = vld [vmem:[%s5 + $0x30] sm:$0xff]
        %v648 = vld [vmem:[%s5 + $0x38] sm:$0xff]
        %v649 = vld [vmem:[%s5 + $0x40] sm:$0xff]
        %v650 = vld [vmem:[%s5 + $0x48] sm:$0xff]
        %v651 = vld [vmem:[%s5 + $0x50] sm:$0xff]
        %v652 = vld [vmem:[%s5 + $0x58] sm:$0xff]
        %v653 = vld [vmem:[%s5 + $0x60] sm:$0xff]
        %v654 = vld [vmem:[%s5 + $0x68] sm:$0xff]
        %v655 = vld [vmem:[%s5 + $0x70] sm:$0xff]
        %v656 = vld [vmem:[%s5 + $0x78] sm:$0xff]
        %v657 = vld [vmem:[%s5 + $0x80] sm:$0xff]
        %v658 = vld [vmem:[%s5 + $0x88] sm:$0xff]
        %v659 = vld [vmem:[%s5 + $0x90] sm:$0xff]
        %v660 = vld [vmem:[%s5 + $0x98] sm:$0xff]
        %v661 = vld [vmem:[%s5 + $0xa0] sm:$0xff]
        %v662 = vld [vmem:[%s5 + $0xa8] sm:$0xff]
        %v663 = vld [vmem:[%s5 + $0xb0] sm:$0xff]
        %v664 = vld [vmem:[%s5 + $0xb8] sm:$0xff]
        %v665 = vld [vmem:[%s5 + $0xc0] sm:$0xff]
        %v666 = vld [vmem:[%s5 + $0xc8] sm:$0xff]
        %v667 = vld [vmem:[%s5 + $0xd0] sm:$0xff]
        %v668 = vld [vmem:[%s5 + $0xd8] sm:$0xff]
        %v669 = vld [vmem:[%s5 + $0xe0] sm:$0xff]
        %v670 = vld [vmem:[%s5 + $0xe8] sm:$0xff]
        %v671 = vld [vmem:[%s5 + $0xf0] sm:$0xff]
        %v672 = vld [vmem:[%s5 + $0xf8] sm:$0xff]
        %v673 = vld [vmem:[%s5 + $0x100] sm:$0xff]
        %v674 = vld [vmem:[%s5 + $0x108] sm:$0xff]
        %v675 = vld [vmem:[%s5 + $0x110] sm:$0xff]
        %v676 = vld [vmem:[%s5 + $0x118] sm:$0xff]
        %v677 = vld [vmem:[%s5 + $0x120] sm:$0xff]
        %v678 = vld [vmem:[%s5 + $0x128] sm:$0xff]
        %v679 = vld [vmem:[%s5 + $0x130] sm:$0xff]
        %v680 = vld [vmem:[%s5 + $0x138] sm:$0xff]
        %v681 = vld [vmem:[%s5 + $0x140] sm:$0xff]
        %v682 = vld [vmem:[%s5 + $0x148] sm:$0xff]
        %v683 = vld [vmem:[%s5 + $0x150] sm:$0xff]
        %v684 = vld [vmem:[%s5 + $0x158] sm:$0xff]
        %v685 = vld [vmem:[%s5 + $0x160] sm:$0xff]
        %v686 = vld [vmem:[%s5 + $0x168] sm:$0xff]
        %v687 = vld [vmem:[%s5 + $0x170] sm:$0xff]
        %v688 = vld [vmem:[%s5 + $0x178] sm:$0xff]
        %v689 = vld [vmem:[%s5 + $0x180] sm:$0xff]
        %v690 = vld [vmem:[%s5 + $0x188] sm:$0xff]
        %v691 = vld [vmem:[%s5 + $0x190] sm:$0xff]
        %v692 = vld [vmem:[%s5 + $0x198] sm:$0xff]
        %v693 = vld [vmem:[%s5 + $0x1a0] sm:$0xff]
        %v694 = vld [vmem:[%s5 + $0x1a8] sm:$0xff]
        %v695 = vld [vmem:[%s5 + $0x1b0] sm:$0xff]
        %v696 = vld [vmem:[%s5 + $0x1b8] sm:$0xff]
        %v697 = vld [vmem:[%s5 + $0x1c0] sm:$0xff]
        %v698 = vld [vmem:[%s5 + $0x1c8] sm:$0xff]
        %v699 = vld [vmem:[%s5 + $0x1d0] sm:$0xff]
        %v700 = vld [vmem:[%s5 + $0x1d8] sm:$0xff]
        %v701 = vld [vmem:[%s5 + $0x1e0] sm:$0xff]
        %v702 = vld [vmem:[%s5 + $0x1e8] sm:$0xff]
        %v703 = vld [vmem:[%s5 + $0x1f0] sm:$0xff]
        %v704 = vld [vmem:[%s5 + $0x1f8] sm:$0xff]
        %v705 = vld [vmem:[%s5 + $0x200] sm:$0xff]
        %v706 = vld [vmem:[%s5 + $0x208] sm:$0xff]
        %v707 = vld [vmem:[%s5 + $0x210] sm:$0xff]
        %v708 = vld [vmem:[%s5 + $0x218] sm:$0xff]
        %v709 = vld [vmem:[%s5 + $0x220] sm:$0xff]
        %v710 = vld [vmem:[%s5 + $0x228] sm:$0xff]
        %v711 = vld [vmem:[%s5 + $0x230] sm:$0xff]
        %v712 = vld [vmem:[%s5 + $0x238] sm:$0xff]
        %v713 = vld [vmem:[%s5 + $0x240] sm:$0xff]
        %v714 = vld [vmem:[%s5 + $0x248] sm:$0xff]
        %v715 = vld [vmem:[%s5 + $0x250] sm:$0xff]
        %v716 = vld [vmem:[%s5 + $0x258] sm:$0xff]
        %v717 = vld [vmem:[%s5 + $0x260] sm:$0xff]
        %v718 = vld [vmem:[%s5 + $0x268] sm:$0xff]
        %v719 = vld [vmem:[%s5 + $0x270] sm:$0xff]
        %v720 = vld [vmem:[%s5 + $0x278] sm:$0xff]
        %v721 = vld [vmem:[%s5 + $0x280] sm:$0xff]
        %v722 = vld [vmem:[%s5 + $0x288] sm:$0xff]
        %v723 = vld [vmem:[%s5 + $0x290] sm:$0xff]
        %v724 = vld [vmem:[%s5 + $0x298] sm:$0xff]
        %v725 = vld [vmem:[%s5 + $0x2a0] sm:$0xff]
        %v726 = vld [vmem:[%s5 + $0x2a8] sm:$0xff]
        %v727 = vld [vmem:[%s5 + $0x2b0] sm:$0xff]
        %v728 = vld [vmem:[%s5 + $0x2b8] sm:$0xff]
        %v729 = vld [vmem:[%s5 + $0x2c0] sm:$0xff]
        %v730 = vld [vmem:[%s5 + $0x2c8] sm:$0xff]
        %v731 = vld [vmem:[%s5 + $0x2d0] sm:$0xff]
        %v732 = vld [vmem:[%s5 + $0x2d8] sm:$0xff]
        %v733 = vld [vmem:[%s5 + $0x2e0] sm:$0xff]
        %v734 = vld [vmem:[%s5 + $0x2e8] sm:$0xff]
        %v735 = vld [vmem:[%s5 + $0x2f0] sm:$0xff]
        %v736 = vld [vmem:[%s5 + $0x2f8] sm:$0xff]
        %v737 = vld [vmem:[%s5 + $0x300] sm:$0xff]
        %v738 = vld [vmem:[%s5 + $0x308] sm:$0xff]
        %v739 = vld [vmem:[%s5 + $0x310] sm:$0xff]
        %v740 = vld [vmem:[%s5 + $0x318] sm:$0xff]
        %v741 = vld [vmem:[%s5 + $0x320] sm:$0xff]
        %v742 = vld [vmem:[%s5 + $0x328] sm:$0xff]
        %v743 = vld [vmem:[%s5 + $0x330] sm:$0xff]
        %v744 = vld [vmem:[%s5 + $0x338] sm:$0xff]
        %v745 = vld [vmem:[%s5 + $0x340] sm:$0xff]
        %v746 = vld [vmem:[%s5 + $0x348] sm:$0xff]
        %v747 = vld [vmem:[%s5 + $0x350] sm:$0xff]
        %v748 = vld [vmem:[%s5 + $0x358] sm:$0xff]
        %v749 = vld [vmem:[%s5 + $0x360] sm:$0xff]
        %v750 = vld [vmem:[%s5 + $0x368] sm:$0xff]
        %v751 = vld [vmem:[%s5 + $0x370] sm:$0xff]
        %v752 = vld [vmem:[%s5 + $0x378] sm:$0xff]
        %v753 = vld [vmem:[%s5 + $0x380] sm:$0xff]
        %v754 = vld [vmem:[%s5 + $0x388] sm:$0xff]
        %v755 = vld [vmem:[%s5 + $0x390] sm:$0xff]
        %v756 = vld [vmem:[%s5 + $0x398] sm:$0xff]
        %v757 = vld [vmem:[%s5 + $0x3a0] sm:$0xff]
        %v758 = vld [vmem:[%s5 + $0x3a8] sm:$0xff]
        %v759 = vld [vmem:[%s5 + $0x3b0] sm:$0xff]
        %v760 = vld [vmem:[%s5 + $0x3b8] sm:$0xff]
        %v761 = vld [vmem:[%s5 + $0x3c0] sm:$0xff]
        %v762 = vld [vmem:[%s5 + $0x3c8] sm:$0xff]
        %v763 = vld [vmem:[%s5 + $0x3d0] sm:$0xff]
        %v764 = vld [vmem:[%s5 + $0x3d8] sm:$0xff]
        %v765 = vld [vmem:[%s5 + $0x3e0] sm:$0xff]
        %v766 = vld [vmem:[%s5 + $0x3e8] sm:$0xff]
        %v767 = vld [vmem:[%s5 + $0x3f0] sm:$0xff]
        %v768 = vld [vmem:[%s5 + $0x3f8] sm:$0xff]
        %v769 = vld [vmem:[%s5 + $0x400] sm:$0xff]
        %v770 = vld [vmem:[%s5 + $0x408] sm:$0xff]
        %v771 = vld [vmem:[%s5 + $0x410] sm:$0xff]
        %v772 = vld [vmem:[%s5 + $0x418] sm:$0xff]
        %v773 = vld [vmem:[%s5 + $0x420] sm:$0xff]
        %v774 = vld [vmem:[%s5 + $0x428] sm:$0xff]
        %v775 = vld [vmem:[%s5 + $0x430] sm:$0xff]
        %v776 = vld [vmem:[%s5 + $0x438] sm:$0xff]
        %v777 = vld [vmem:[%s5 + $0x440] sm:$0xff]
        %v778 = vld [vmem:[%s5 + $0x448] sm:$0xff]
        %v779 = vld [vmem:[%s5 + $0x450] sm:$0xff]
        %v780 = vld [vmem:[%s5 + $0x458] sm:$0xff]
        %v781 = vld [vmem:[%s5 + $0x460] sm:$0xff]
        %v782 = vld [vmem:[%s5 + $0x468] sm:$0xff]
        %v783 = vld [vmem:[%s5 + $0x470] sm:$0xff]
        %v784 = vld [vmem:[%s5 + $0x478] sm:$0xff]
        %v785 = vld [vmem:[%s5 + $0x480] sm:$0xff]
        %v786 = vld [vmem:[%s5 + $0x488] sm:$0xff]
        %v787 = vld [vmem:[%s5 + $0x490] sm:$0xff]
        %v788 = vld [vmem:[%s5 + $0x498] sm:$0xff]
        %v789 = vld [vmem:[%s5 + $0x4a0] sm:$0xff]
        %v790 = vld [vmem:[%s5 + $0x4a8] sm:$0xff]
        %v791 = vld [vmem:[%s5 + $0x4b0] sm:$0xff]
        %v792 = vld [vmem:[%s5 + $0x4b8] sm:$0xff]
        %v793 = vld [vmem:[%s5 + $0x4c0] sm:$0xff]
        %v794 = vld [vmem:[%s5 + $0x4c8] sm:$0xff]
        %v795 = vld [vmem:[%s5 + $0x4d0] sm:$0xff]
        %v796 = vld [vmem:[%s5 + $0x4d8] sm:$0xff]
        %v797 = vld [vmem:[%s5 + $0x4e0] sm:$0xff]
        %v798 = vld [vmem:[%s5 + $0x4e8] sm:$0xff]
        %v799 = vld [vmem:[%s5 + $0x4f0] sm:$0xff]
        %v800 = vld [vmem:[%s5 + $0x4f8] sm:$0xff]
        %v801 = vld [vmem:[%s5 + $0x500] sm:$0xff]
        %v802 = vld [vmem:[%s5 + $0x508] sm:$0xff]
        %v803 = vld [vmem:[%s5 + $0x510] sm:$0xff]
        %v804 = vld [vmem:[%s5 + $0x518] sm:$0xff]
        %v805 = vld [vmem:[%s5 + $0x520] sm:$0xff]
        %v806 = vld [vmem:[%s5 + $0x528] sm:$0xff]
        %v807 = vld [vmem:[%s5 + $0x530] sm:$0xff]
        %v808 = vld [vmem:[%s5 + $0x538] sm:$0xff]
        %v809 = vld [vmem:[%s5 + $0x540] sm:$0xff]
        %v810 = vld [vmem:[%s5 + $0x548] sm:$0xff]
        %v811 = vld [vmem:[%s5 + $0x550] sm:$0xff]
        %v812 = vld [vmem:[%s5 + $0x558] sm:$0xff]
        %v813 = vld [vmem:[%s5 + $0x560] sm:$0xff]
        %v814 = vld [vmem:[%s5 + $0x568] sm:$0xff]
        %v815 = vld [vmem:[%s5 + $0x570] sm:$0xff]
        %v816 = vld [vmem:[%s5 + $0x578] sm:$0xff]
        %v817 = vld [vmem:[%s5 + $0x580] sm:$0xff]
        %v818 = vld [vmem:[%s5 + $0x588] sm:$0xff]
        %v819 = vld [vmem:[%s5 + $0x590] sm:$0xff]
        %v820 = vld [vmem:[%s5 + $0x598] sm:$0xff]
        %v821 = vld [vmem:[%s5 + $0x5a0] sm:$0xff]
        %v822 = vld [vmem:[%s5 + $0x5a8] sm:$0xff]
        %v823 = vld [vmem:[%s5 + $0x5b0] sm:$0xff]
        %v824 = vld [vmem:[%s5 + $0x5b8] sm:$0xff]
        %v825 = vld [vmem:[%s5 + $0x5c0] sm:$0xff]
        %v826 = vld [vmem:[%s5 + $0x5c8] sm:$0xff]
        %v827 = vld [vmem:[%s5 + $0x5d0] sm:$0xff]
        %v828 = vld [vmem:[%s5 + $0x5d8] sm:$0xff]
        %v829 = vld [vmem:[%s5 + $0x5e0] sm:$0xff]
        %v830 = vld [vmem:[%s5 + $0x5e8] sm:$0xff]
        %v831 = vld [vmem:[%s5 + $0x5f0] sm:$0xff]
        %v832 = vld [vmem:[%s5 + $0x5f8] sm:$0xff]
        %v833 = vld [vmem:[%s5 + $0x600] sm:$0xff]
        %v834 = vld [vmem:[%s5 + $0x608] sm:$0xff]
        %v835 = vld [vmem:[%s5 + $0x610] sm:$0xff]
        %v836 = vld [vmem:[%s5 + $0x618] sm:$0xff]
        %v837 = vld [vmem:[%s5 + $0x620] sm:$0xff]
        %v838 = vld [vmem:[%s5 + $0x628] sm:$0xff]
        %v839 = vld [vmem:[%s5 + $0x630] sm:$0xff]
        %v840 = vld [vmem:[%s5 + $0x638] sm:$0xff]
        %v841 = vld [vmem:[%s5 + $0x640] sm:$0xff]
        %v842 = vld [vmem:[%s5 + $0x648] sm:$0xff]
        %v843 = vld [vmem:[%s5 + $0x650] sm:$0xff]
        %v844 = vld [vmem:[%s5 + $0x658] sm:$0xff]
        %v845 = vld [vmem:[%s5 + $0x660] sm:$0xff]
        %v846 = vld [vmem:[%s5 + $0x668] sm:$0xff]
        %v847 = vld [vmem:[%s5 + $0x670] sm:$0xff]
        %v848 = vld [vmem:[%s5 + $0x678] sm:$0xff]
        %v849 = vld [vmem:[%s5 + $0x680] sm:$0xff]
        %v850 = vld [vmem:[%s5 + $0x688] sm:$0xff]
        %v851 = vld [vmem:[%s5 + $0x690] sm:$0xff]
        %v852 = vld [vmem:[%s5 + $0x698] sm:$0xff]
        %v853 = vld [vmem:[%s5 + $0x6a0] sm:$0xff]
        %v854 = vld [vmem:[%s5 + $0x6a8] sm:$0xff]
        %v855 = vld [vmem:[%s5 + $0x6b0] sm:$0xff]
        %v856 = vld [vmem:[%s5 + $0x6b8] sm:$0xff]
        %v857 = vld [vmem:[%s5 + $0x6c0] sm:$0xff]
        %v858 = vld [vmem:[%s5 + $0x6c8] sm:$0xff]
        %v859 = vld [vmem:[%s5 + $0x6d0] sm:$0xff]
        %v860 = vld [vmem:[%s5 + $0x6d8] sm:$0xff]
        %v861 = vld [vmem:[%s5 + $0x6e0] sm:$0xff]
        %v862 = vld [vmem:[%s5 + $0x6e8] sm:$0xff]
        %v863 = vld [vmem:[%s5 + $0x6f0] sm:$0xff]
        %v864 = vld [vmem:[%s5 + $0x6f8] sm:$0xff]
        %v865 = vld [vmem:[%s5 + $0x700] sm:$0xff]
        %v866 = vld [vmem:[%s5 + $0x708] sm:$0xff]
        %v867 = vld [vmem:[%s5 + $0x710] sm:$0xff]
        %v868 = vld [vmem:[%s5 + $0x718] sm:$0xff]
        %v869 = vld [vmem:[%s5 + $0x720] sm:$0xff]
        %v870 = vld [vmem:[%s5 + $0x728] sm:$0xff]
        %v871 = vld [vmem:[%s5 + $0x730] sm:$0xff]
        %v872 = vld [vmem:[%s5 + $0x738] sm:$0xff]
        %v873 = vld [vmem:[%s5 + $0x740] sm:$0xff]
        %v874 = vld [vmem:[%s5 + $0x748] sm:$0xff]
        %v875 = vld [vmem:[%s5 + $0x750] sm:$0xff]
        %v876 = vld [vmem:[%s5 + $0x758] sm:$0xff]
        %v877 = vld [vmem:[%s5 + $0x760] sm:$0xff]
        %v878 = vld [vmem:[%s5 + $0x768] sm:$0xff]
        %v879 = vld [vmem:[%s5 + $0x770] sm:$0xff]
        %v880 = vld [vmem:[%s5 + $0x778] sm:$0xff]
        %881 = vmatprep.subr.mxu0 %v717
        %882 = vmatpush1.msra.mxu0 %v716
        %883 = vmatprep.subr.mxu0 %v712
        %884 = vmatpush1.msra.mxu0 %v711
        %885 = vmatprep.subr.mxu0 %v707
        %886 = vmatpush1.msra.mxu0 %v706
        %887 = vmatprep.subr.mxu0 %v702
        %888 = vmatpush1.msra.mxu0 %v701
        %889 = vmatprep.subr.mxu0 %v697
        %890 = vmatpush1.msra.mxu0 %v696
        %891 = vmatprep.subr.mxu0 %v692
        %892 = vmatpush1.msra.mxu0 %v691
        %893 = vmatprep.subr.mxu0 %v687
        %894 = vmatpush1.msra.mxu0 %v686
        %895 = vmatprep.subr.mxu0 %v682
        %896 = vmatpush1.msra.mxu0 %v681
        %897 = vmatprep.subr.mxu0 %v677
        %898 = vmatpush1.msra.mxu0 %v676
        %899 = vmatprep.subr.mxu0 %v672
        %900 = vmatpush1.msra.mxu0 %v671
        %901 = vmatprep.subr.mxu0 %v667
        %902 = vmatpush1.msra.mxu0 %v666
        %903 = vmatprep.subr.mxu0 %v662
        %904 = vmatpush1.msra.mxu0 %v661
        %905 = vmatprep.subr.mxu0 %v657
        %906 = vmatpush1.msra.mxu0 %v656
        %907 = vmatprep.subr.mxu0 %v652
        %908 = vmatpush1.msra.mxu0 %v651
        %909 = vmatprep.subr.mxu0 %v647
        %910 = vmatpush1.msra.mxu0 %v646
        %911 = vmatprep.subr.mxu0 %v642
        %912 = vmatpush1.msra.mxu0 %v641
        %913 = vmatprep.subr.mxu0 %v797
        %914 = vmatpush2.msra.mxu0 %v796
        %915 = vmatprep.subr.mxu0 %v792
        %916 = vmatpush2.msra.mxu0 %v791
        %917 = vmatprep.subr.mxu0 %v787
        %918 = vmatpush2.msra.mxu0 %v786
        %919 = vmatprep.subr.mxu0 %v782
        %920 = vmatpush2.msra.mxu0 %v781
        %921 = vmatprep.subr.mxu0 %v777
        %922 = vmatpush2.msra.mxu0 %v776
        %923 = vmatprep.subr.mxu0 %v772
        %924 = vmatpush2.msra.mxu0 %v771
        %925 = vmatprep.subr.mxu0 %v767
        %926 = vmatpush2.msra.mxu0 %v766
        %927 = vmatprep.subr.mxu0 %v762
        %928 = vmatpush2.msra.mxu0 %v761
        %929 = vmatprep.subr.mxu0 %v757
        %930 = vmatpush2.msra.mxu0 %v756
        %931 = vmatprep.subr.mxu0 %v752
        %932 = vmatpush2.msra.mxu0 %v751
        %933 = vmatprep.subr.mxu0 %v747
        %934 = vmatpush2.msra.mxu0 %v746
        %935 = vmatprep.subr.mxu0 %v742
        %936 = vmatpush2.msra.mxu0 %v741
        %937 = vmatprep.subr.mxu0 %v737
        %938 = vmatpush2.msra.mxu0 %v736
        %939 = vmatprep.subr.mxu0 %v732
        %940 = vmatpush2.msra.mxu0 %v731
        %941 = vmatprep.subr.mxu0 %v727
        %942 = vmatpush2.msra.mxu0 %v726
        %943 = vmatprep.subr.mxu0 %v722
        %944 = vmatpush2.msra.mxu0 %v721
        %945 = vmatprep.mubr.f32.mxu0 %v564
        %946 = vmatmul.mubr.f32.gmra.mxu0 %v490
        %v947 = vpop.f32.mrf.mxu0
        %v948 = vadd.f32 0.0, %v947
        %v949 = vpop.f32.mrf.mxu0
        %v950 = vadd.f32 0.0, %v949
        %951 = vdwg.mxu0
        %952 = vmatprep.subr.mxu0 %v877
        %953 = vmatpush1.msra.mxu0 %v876
        %954 = vmatprep.subr.mxu0 %v872
        %955 = vmatpush1.msra.mxu0 %v871
        %956 = vmatprep.subr.mxu0 %v867
        %957 = vmatpush1.msra.mxu0 %v866
        %958 = vmatprep.subr.mxu0 %v862
        %959 = vmatpush1.msra.mxu0 %v861
        %960 = vmatprep.subr.mxu0 %v857
        %961 = vmatpush1.msra.mxu0 %v856
        %962 = vmatprep.subr.mxu0 %v852
        %963 = vmatpush1.msra.mxu0 %v851
        %964 = vmatprep.subr.mxu0 %v847
        %965 = vmatpush1.msra.mxu0 %v846
        %966 = vmatprep.subr.mxu0 %v842
        %967 = vmatpush1.msra.mxu0 %v841
        %968 = vmatprep.subr.mxu0 %v837
        %969 = vmatpush1.msra.mxu0 %v836
        %970 = vmatprep.subr.mxu0 %v832
        %971 = vmatpush1.msra.mxu0 %v831
        %972 = vmatprep.subr.mxu0 %v827
        %973 = vmatpush1.msra.mxu0 %v826
        %974 = vmatprep.subr.mxu0 %v822
        %975 = vmatpush1.msra.mxu0 %v821
        %976 = vmatprep.subr.mxu0 %v817
        %977 = vmatpush1.msra.mxu0 %v816
        %978 = vmatprep.subr.mxu0 %v812
        %979 = vmatpush1.msra.mxu0 %v811
        %980 = vmatprep.subr.mxu0 %v807
        %981 = vmatpush1.msra.mxu0 %v806
        %982 = vmatprep.subr.mxu0 %v802
        %983 = vmatpush1.msra.mxu0 %v801
        %984 = vmatprep.subr.mxu0 0.0
        %985 = vmatpush2.msra.mxu0 0.0
        %986 = vmatprep.subr.mxu0 0.0
        %987 = vmatpush2.msra.mxu0 0.0
        %988 = vmatprep.subr.mxu0 0.0
        %989 = vmatpush2.msra.mxu0 0.0
        %990 = vmatprep.subr.mxu0 0.0
        %991 = vmatpush2.msra.mxu0 0.0
        %992 = vmatprep.subr.mxu0 0.0
        %993 = vmatpush2.msra.mxu0 0.0
        %994 = vmatprep.subr.mxu0 0.0
        %995 = vmatpush2.msra.mxu0 0.0
        %996 = vmatprep.subr.mxu0 0.0
        %997 = vmatpush2.msra.mxu0 0.0
        %998 = vmatprep.subr.mxu0 0.0
        %999 = vmatpush2.msra.mxu0 0.0
        %1000 = vmatprep.subr.mxu0 0.0
        %1001 = vmatpush2.msra.mxu0 0.0
        %1002 = vmatprep.subr.mxu0 0.0
        %1003 = vmatpush2.msra.mxu0 0.0
        %1004 = vmatprep.subr.mxu0 0.0
        %1005 = vmatpush2.msra.mxu0 0.0
        %1006 = vmatprep.subr.mxu0 0.0
        %1007 = vmatpush2.msra.mxu0 0.0
        %1008 = vmatprep.subr.mxu0 0.0
        %1009 = vmatpush2.msra.mxu0 0.0
        %1010 = vmatprep.subr.mxu0 0.0
        %1011 = vmatpush2.msra.mxu0 0.0
        %1012 = vmatprep.subr.mxu0 0.0
        %1013 = vmatpush2.msra.mxu0 0.0
        %1014 = vmatprep.subr.mxu0 0.0
        %1015 = vmatpush2.msra.mxu0 0.0
        %1016 = vmatprep.mubr.f32.mxu0 0.0
        %1017 = vmatmul.mubr.f32.gmra.mxu0 %v638
        %v1018 = vpop.f32.mrf.mxu0
        %v1019 = vadd.f32 %v948, %v1018
        %v1020 = vpop.f32.mrf.mxu0
        %v1021 = vadd.f32 %v950, %v1020
        %1022 = vdwg.mxu0
        %1023 = vmatprep.subr.mxu0 %v719
        %1024 = vmatpush1.msra.mxu0 %v718
        %1025 = vmatprep.subr.mxu0 %v714
        %1026 = vmatpush1.msra.mxu0 %v713
        %1027 = vmatprep.subr.mxu0 %v709
        %1028 = vmatpush1.msra.mxu0 %v708
        %1029 = vmatprep.subr.mxu0 %v704
        %1030 = vmatpush1.msra.mxu0 %v703
        %1031 = vmatprep.subr.mxu0 %v699
        %1032 = vmatpush1.msra.mxu0 %v698
        %1033 = vmatprep.subr.mxu0 %v694
        %1034 = vmatpush1.msra.mxu0 %v693
        %1035 = vmatprep.subr.mxu0 %v689
        %1036 = vmatpush1.msra.mxu0 %v688
        %1037 = vmatprep.subr.mxu0 %v684
        %1038 = vmatpush1.msra.mxu0 %v683
        %1039 = vmatprep.subr.mxu0 %v679
        %1040 = vmatpush1.msra.mxu0 %v678
        %1041 = vmatprep.subr.mxu0 %v674
        %1042 = vmatpush1.msra.mxu0 %v673
        %1043 = vmatprep.subr.mxu0 %v669
        %1044 = vmatpush1.msra.mxu0 %v668
        %1045 = vmatprep.subr.mxu0 %v664
        %1046 = vmatpush1.msra.mxu0 %v663
        %1047 = vmatprep.subr.mxu0 %v659
        %1048 = vmatpush1.msra.mxu0 %v658
        %1049 = vmatprep.subr.mxu0 %v654
        %1050 = vmatpush1.msra.mxu0 %v653
        %1051 = vmatprep.subr.mxu0 %v649
        %1052 = vmatpush1.msra.mxu0 %v648
        %1053 = vmatprep.subr.mxu0 %v644
        %1054 = vmatpush1.msra.mxu0 %v643
        %1055 = vmatprep.subr.mxu0 %v799
        %1056 = vmatpush2.msra.mxu0 %v798
        %1057 = vmatprep.subr.mxu0 %v794
        %1058 = vmatpush2.msra.mxu0 %v793
        %1059 = vmatprep.subr.mxu0 %v789
        %1060 = vmatpush2.msra.mxu0 %v788
        %1061 = vmatprep.subr.mxu0 %v784
        %1062 = vmatpush2.msra.mxu0 %v783
        %1063 = vmatprep.subr.mxu0 %v779
        %1064 = vmatpush2.msra.mxu0 %v778
        %1065 = vmatprep.subr.mxu0 %v774
        %1066 = vmatpush2.msra.mxu0 %v773
        %1067 = vmatprep.subr.mxu0 %v769
        %1068 = vmatpush2.msra.mxu0 %v768
        %1069 = vmatprep.subr.mxu0 %v764
        %1070 = vmatpush2.msra.mxu0 %v763
        %1071 = vmatprep.subr.mxu0 %v759
        %1072 = vmatpush2.msra.mxu0 %v758
        %1073 = vmatprep.subr.mxu0 %v754
        %1074 = vmatpush2.msra.mxu0 %v753
        %1075 = vmatprep.subr.mxu0 %v749
        %1076 = vmatpush2.msra.mxu0 %v748
        %1077 = vmatprep.subr.mxu0 %v744
        %1078 = vmatpush2.msra.mxu0 %v743
        %1079 = vmatprep.subr.mxu0 %v739
        %1080 = vmatpush2.msra.mxu0 %v738
        %1081 = vmatprep.subr.mxu0 %v734
        %1082 = vmatpush2.msra.mxu0 %v733
        %1083 = vmatprep.subr.mxu0 %v729
        %1084 = vmatpush2.msra.mxu0 %v728
        %1085 = vmatprep.subr.mxu0 %v724
        %1086 = vmatpush2.msra.mxu0 %v723
        %1087 = vmatprep.mubr.f32.mxu0 %v564
        %1088 = vmatmul.mubr.f32.gmra.mxu0 %v490
        %v1089 = vpop.f32.mrf.mxu0
        %v1090 = vadd.f32 0.0, %v1089
        %v1091 = vpop.f32.mrf.mxu0
        %v1092 = vadd.f32 0.0, %v1091
        %1093 = vdwg.mxu0
        %1094 = vmatprep.subr.mxu0 %v879
        %1095 = vmatpush1.msra.mxu0 %v878
        %1096 = vmatprep.subr.mxu0 %v874
        %1097 = vmatpush1.msra.mxu0 %v873
        %1098 = vmatprep.subr.mxu0 %v869
        %1099 = vmatpush1.msra.mxu0 %v868
        %1100 = vmatprep.subr.mxu0 %v864
        %1101 = vmatpush1.msra.mxu0 %v863
        %1102 = vmatprep.subr.mxu0 %v859
        %1103 = vmatpush1.msra.mxu0 %v858
        %1104 = vmatprep.subr.mxu0 %v854
        %1105 = vmatpush1.msra.mxu0 %v853
        %1106 = vmatprep.subr.mxu0 %v849
        %1107 = vmatpush1.msra.mxu0 %v848
        %1108 = vmatprep.subr.mxu0 %v844
        %1109 = vmatpush1.msra.mxu0 %v843
        %1110 = vmatprep.subr.mxu0 %v839
        %1111 = vmatpush1.msra.mxu0 %v838
        %1112 = vmatprep.subr.mxu0 %v834
        %1113 = vmatpush1.msra.mxu0 %v833
        %1114 = vmatprep.subr.mxu0 %v829
        %1115 = vmatpush1.msra.mxu0 %v828
        %1116 = vmatprep.subr.mxu0 %v824
        %1117 = vmatpush1.msra.mxu0 %v823
        %1118 = vmatprep.subr.mxu0 %v819
        %1119 = vmatpush1.msra.mxu0 %v818
        %1120 = vmatprep.subr.mxu0 %v814
        %1121 = vmatpush1.msra.mxu0 %v813
        %1122 = vmatprep.subr.mxu0 %v809
        %1123 = vmatpush1.msra.mxu0 %v808
        %1124 = vmatprep.subr.mxu0 %v804
        %1125 = vmatpush1.msra.mxu0 %v803
        %1126 = vmatprep.subr.mxu0 0.0
        %1127 = vmatpush2.msra.mxu0 0.0
        %1128 = vmatprep.subr.mxu0 0.0
        %1129 = vmatpush2.msra.mxu0 0.0
        %1130 = vmatprep.subr.mxu0 0.0
        %1131 = vmatpush2.msra.mxu0 0.0
        %1132 = vmatprep.subr.mxu0 0.0
        %1133 = vmatpush2.msra.mxu0 0.0
        %1134 = vmatprep.subr.mxu0 0.0
        %1135 = vmatpush2.msra.mxu0 0.0
        %1136 = vmatprep.subr.mxu0 0.0
        %1137 = vmatpush2.msra.mxu0 0.0
        %1138 = vmatprep.subr.mxu0 0.0
        %1139 = vmatpush2.msra.mxu0 0.0
        %1140 = vmatprep.subr.mxu0 0.0
        %1141 = vmatpush2.msra.mxu0 0.0
        %1142 = vmatprep.subr.mxu0 0.0
        %1143 = vmatpush2.msra.mxu0 0.0
        %1144 = vmatprep.subr.mxu0 0.0
        %1145 = vmatpush2.msra.mxu0 0.0
        %1146 = vmatprep.subr.mxu0 0.0
        %1147 = vmatpush2.msra.mxu0 0.0
        %1148 = vmatprep.subr.mxu0 0.0
        %1149 = vmatpush2.msra.mxu0 0.0
        %1150 = vmatprep.subr.mxu0 0.0
        %1151 = vmatpush2.msra.mxu0 0.0
        %1152 = vmatprep.subr.mxu0 0.0
        %1153 = vmatpush2.msra.mxu0 0.0
        %1154 = vmatprep.subr.mxu0 0.0
        %1155 = vmatpush2.msra.mxu0 0.0
        %1156 = vmatprep.subr.mxu0 0.0
        %1157 = vmatpush2.msra.mxu0 0.0
        %1158 = vmatprep.mubr.f32.mxu0 0.0
        %1159 = vmatmul.mubr.f32.gmra.mxu0 %v638
        %v1160 = vpop.f32.mrf.mxu0
        %v1161 = vadd.f32 %v1090, %v1160
        %v1162 = vpop.f32.mrf.mxu0
        %v1163 = vadd.f32 %v1092, %v1162
        %1164 = vdwg.mxu0
        %1165 = vmatprep.subr.mxu0 0.0
        %1166 = vmatpush1.msra.mxu0 %v720
        %1167 = vmatprep.subr.mxu0 0.0
        %1168 = vmatpush1.msra.mxu0 %v715
        %1169 = vmatprep.subr.mxu0 0.0
        %1170 = vmatpush1.msra.mxu0 %v710
        %1171 = vmatprep.subr.mxu0 0.0
        %1172 = vmatpush1.msra.mxu0 %v705
        %1173 = vmatprep.subr.mxu0 0.0
        %1174 = vmatpush1.msra.mxu0 %v700
        %1175 = vmatprep.subr.mxu0 0.0
        %1176 = vmatpush1.msra.mxu0 %v695
        %1177 = vmatprep.subr.mxu0 0.0
        %1178 = vmatpush1.msra.mxu0 %v690
        %1179 = vmatprep.subr.mxu0 0.0
        %1180 = vmatpush1.msra.mxu0 %v685
        %1181 = vmatprep.subr.mxu0 0.0
        %1182 = vmatpush1.msra.mxu0 %v680
        %1183 = vmatprep.subr.mxu0 0.0
        %1184 = vmatpush1.msra.mxu0 %v675
        %1185 = vmatprep.subr.mxu0 0.0
        %1186 = vmatpush1.msra.mxu0 %v670
        %1187 = vmatprep.subr.mxu0 0.0
        %1188 = vmatpush1.msra.mxu0 %v665
        %1189 = vmatprep.subr.mxu0 0.0
        %1190 = vmatpush1.msra.mxu0 %v660
        %1191 = vmatprep.subr.mxu0 0.0
        %1192 = vmatpush1.msra.mxu0 %v655
        %1193 = vmatprep.subr.mxu0 0.0
        %1194 = vmatpush1.msra.mxu0 %v650
        %1195 = vmatprep.subr.mxu0 0.0
        %1196 = vmatpush1.msra.mxu0 %v645
        %1197 = vmatprep.subr.mxu0 0.0
        %1198 = vmatpush2.msra.mxu0 %v800
        %1199 = vmatprep.subr.mxu0 0.0
        %1200 = vmatpush2.msra.mxu0 %v795
        %1201 = vmatprep.subr.mxu0 0.0
        %1202 = vmatpush2.msra.mxu0 %v790
        %1203 = vmatprep.subr.mxu0 0.0
        %1204 = vmatpush2.msra.mxu0 %v785
        %1205 = vmatprep.subr.mxu0 0.0
        %1206 = vmatpush2.msra.mxu0 %v780
        %1207 = vmatprep.subr.mxu0 0.0
        %1208 = vmatpush2.msra.mxu0 %v775
        %1209 = vmatprep.subr.mxu0 0.0
        %1210 = vmatpush2.msra.mxu0 %v770
        %1211 = vmatprep.subr.mxu0 0.0
        %1212 = vmatpush2.msra.mxu0 %v765
        %1213 = vmatprep.subr.mxu0 0.0
        %1214 = vmatpush2.msra.mxu0 %v760
        %1215 = vmatprep.subr.mxu0 0.0
        %1216 = vmatpush2.msra.mxu0 %v755
        %1217 = vmatprep.subr.mxu0 0.0
        %1218 = vmatpush2.msra.mxu0 %v750
        %1219 = vmatprep.subr.mxu0 0.0
        %1220 = vmatpush2.msra.mxu0 %v745
        %1221 = vmatprep.subr.mxu0 0.0
        %1222 = vmatpush2.msra.mxu0 %v740
        %1223 = vmatprep.subr.mxu0 0.0
        %1224 = vmatpush2.msra.mxu0 %v735
        %1225 = vmatprep.subr.mxu0 0.0
        %1226 = vmatpush2.msra.mxu0 %v730
        %1227 = vmatprep.subr.mxu0 0.0
        %1228 = vmatpush2.msra.mxu0 %v725
        %1229 = vmatprep.mubr.f32.mxu0 %v564
        %1230 = vmatmul.mubr.f32.gmra.mxu0 %v490
        %v1231 = vpop.f32.mrf.mxu0
        %v1232 = vadd.f32 0.0, %v1231
        %v1233 = vpop.f32.mrf.mxu0
        %1234 = vdwg.mxu0
        %1235 = vmatprep.subr.mxu0 0.0
        %1236 = vmatpush1.msra.mxu0 %v880
        %1237 = vmatprep.subr.mxu0 0.0
        %1238 = vmatpush1.msra.mxu0 %v875
        %1239 = vmatprep.subr.mxu0 0.0
        %1240 = vmatpush1.msra.mxu0 %v870
        %1241 = vmatprep.subr.mxu0 0.0
        %1242 = vmatpush1.msra.mxu0 %v865
        %1243 = vmatprep.subr.mxu0 0.0
        %1244 = vmatpush1.msra.mxu0 %v860
        %1245 = vmatprep.subr.mxu0 0.0
        %1246 = vmatpush1.msra.mxu0 %v855
        %1247 = vmatprep.subr.mxu0 0.0
        %1248 = vmatpush1.msra.mxu0 %v850
        %1249 = vmatprep.subr.mxu0 0.0
        %1250 = vmatpush1.msra.mxu0 %v845
        %1251 = vmatprep.subr.mxu0 0.0
        %1252 = vmatpush1.msra.mxu0 %v840
        %1253 = vmatprep.subr.mxu0 0.0
        %1254 = vmatpush1.msra.mxu0 %v835
        %1255 = vmatprep.subr.mxu0 0.0
        %1256 = vmatpush1.msra.mxu0 %v830
        %1257 = vmatprep.subr.mxu0 0.0
        %1258 = vmatpush1.msra.mxu0 %v825
        %1259 = vmatprep.subr.mxu0 0.0
        %1260 = vmatpush1.msra.mxu0 %v820
        %1261 = vmatprep.subr.mxu0 0.0
        %1262 = vmatpush1.msra.mxu0 %v815
        %1263 = vmatprep.subr.mxu0 0.0
        %1264 = vmatpush1.msra.mxu0 %v810
        %1265 = vmatprep.subr.mxu0 0.0
        %1266 = vmatpush1.msra.mxu0 %v805
        %1267 = vmatprep.subr.mxu0 0.0
        %1268 = vmatpush2.msra.mxu0 0.0
        %1269 = vmatprep.subr.mxu0 0.0
        %1270 = vmatpush2.msra.mxu0 0.0
        %1271 = vmatprep.subr.mxu0 0.0
        %1272 = vmatpush2.msra.mxu0 0.0
        %1273 = vmatprep.subr.mxu0 0.0
        %1274 = vmatpush2.msra.mxu0 0.0
        %1275 = vmatprep.subr.mxu0 0.0
        %1276 = vmatpush2.msra.mxu0 0.0
        %1277 = vmatprep.subr.mxu0 0.0
        %1278 = vmatpush2.msra.mxu0 0.0
        %1279 = vmatprep.subr.mxu0 0.0
        %1280 = vmatpush2.msra.mxu0 0.0
        %1281 = vmatprep.subr.mxu0 0.0
        %1282 = vmatpush2.msra.mxu0 0.0
        %1283 = vmatprep.subr.mxu0 0.0
        %1284 = vmatpush2.msra.mxu0 0.0
        %1285 = vmatprep.subr.mxu0 0.0
        %1286 = vmatpush2.msra.mxu0 0.0
        %1287 = vmatprep.subr.mxu0 0.0
        %1288 = vmatpush2.msra.mxu0 0.0
        %1289 = vmatprep.subr.mxu0 0.0
        %1290 = vmatpush2.msra.mxu0 0.0
        %1291 = vmatprep.subr.mxu0 0.0
        %1292 = vmatpush2.msra.mxu0 0.0
        %1293 = vmatprep.subr.mxu0 0.0
        %1294 = vmatpush2.msra.mxu0 0.0
        %1295 = vmatprep.subr.mxu0 0.0
        %1296 = vmatpush2.msra.mxu0 0.0
        %1297 = vmatprep.subr.mxu0 0.0
        %1298 = vmatpush2.msra.mxu0 0.0
        %1299 = vmatprep.mubr.f32.mxu0 0.0
        %1300 = vmatmul.mubr.f32.gmra.mxu0 %v638
        %v1301 = vpop.f32.mrf.mxu0
        %v1302 = vadd.f32 %v1232, %v1301
        %v1303 = vpop.f32.mrf.mxu0
        %1304 = vdwg.mxu0
        %v1305 = vlaneseq
        %v1306 = vshrl.u32 %v1305, 7
        %v1307 = vadd.s32 %v1306, 8
        %v1308 = vadd.s32 %v1306, 16
        %v1309 = vadd.s32 %v1306, 24
        %v1310 = vld [vmem:[%s6] sm:$0x1]
        %v1312 = vlaneseq
        %v1313 = vshrl.u32 %v1312, 7
        %v1314 = vsub.s32 0, %v1313
        %v1315 = vrot.slane %v1310, %v1314
        %v1317 = vlaneseq
        %v1318 = vshrl.u32 %v1317, 7
        %v1319 = vsub.s32 0, %v1318
        %v1320 = vrot.slane %v1019, %v1319
        %vm1321 = vcmp.ge.s32.totalorder %v1306, 17
        %vm1322 = vcmp.ge.s32.totalorder %v1307, 17
        %vm1323 = vcmp.ge.s32.totalorder %v1308, 17
        %vm1324 = vcmp.ge.s32.totalorder %v1309, 17
        %v1325 = vlaneseq
        %v1326 = vshrl.u32 %v1325, 7
        %v1327 = vsub.s32 1, %v1326
        %v1328 = vrot.slane %v1019, %v1327
        %v1329 = vsel %vm1321, 1, 0
        %v1330 = vsel %vm1322, 1, 0
        %v1331 = vsel %vm1323, 1, 0
        %v1332 = vsel %vm1324, 1, 0
        %vm1333 = vcmp.eq.s32.totalorder %v1329, 1
        %vm1334 = vcmp.eq.s32.totalorder %v1330, 1
        %vm1335 = vcmp.eq.s32.totalorder %v1331, 1
        %vm1336 = vcmp.eq.s32.totalorder %v1332, 1
        %v1337 = vsel %vm1333, %v1328, %v1320
        %v1338 = vsel %vm1334, %v1328, %v1320
        %v1339 = vsel %vm1335, %v1328, %v1320
        %v1340 = vsel %vm1336, %v1328, %v1320
        %v1341 = vadd.f32 %v1315, %v1337
        %v1342 = vadd.f32 %v1315, %v1338
        %v1343 = vadd.f32 %v1315, %v1339
        %v1344 = vadd.f32 %v1315, %v1340
        %vm1345 = vcmp.ge.s32.totalorder %v1306, 16
        %vm1346 = vcmp.ge.s32.totalorder %v1307, 16
        %vm1347 = vcmp.ge.s32.totalorder %v1308, 16
        %vm1348 = vcmp.ge.s32.totalorder %v1309, 16
        %v1349 = vsel %vm1345, 1, 0
        %v1350 = vsel %vm1346, 1, 0
        %v1351 = vsel %vm1347, 1, 0
        %v1352 = vsel %vm1348, 1, 0
        %vm1353 = vcmp.eq.s32.totalorder %v1349, 1
        %vm1354 = vcmp.eq.s32.totalorder %v1350, 1
        %vm1355 = vcmp.eq.s32.totalorder %v1351, 1
        %vm1356 = vcmp.eq.s32.totalorder %v1352, 1
        %v1357 = vsel %vm1353, %v1328, %v1320
        %v1358 = vsel %vm1354, %v1328, %v1320
        %v1359 = vsel %vm1355, %v1328, %v1320
        %v1360 = vsel %vm1356, %v1328, %v1320
        %1365 = vrot.lane.b32.xlu0 %v1357, 64
        %v1366 = vpop.permute.xlu0 %1365
        %1367 = vrot.lane.b32.xlu0 %v1358, 64
        %v1368 = vpop.permute.xlu0 %1367
        %1369 = vrot.lane.b32.xlu0 %v1359, 64
        %v1370 = vpop.permute.xlu0 %1369
        %1371 = vrot.lane.b32.xlu0 %v1360, 64
        %v1372 = vpop.permute.xlu0 %1371
        %v1377 = vadd.f32 %v1341, %v1366
        %v1378 = vadd.f32 %v1342, %v1368
        %v1379 = vadd.f32 %v1343, %v1370
        %v1380 = vadd.f32 %v1344, %v1372
        %v1381 = vlaneseq
        %v1382 = vshrl.u32 %v1381, 7
        %v1383 = vsub.s32 0, %v1382
        %v1384 = vrot.slane %v1021, %v1383
        %vm1385 = vcmp.ge.s32.totalorder %v1306, 15
        %vm1386 = vcmp.ge.s32.totalorder %v1307, 15
        %vm1387 = vcmp.ge.s32.totalorder %v1308, 15
        %vm1388 = vcmp.ge.s32.totalorder %v1309, 15
        %v1389 = vlaneseq
        %v1390 = vshrl.u32 %v1389, 7
        %v1391 = vsub.s32 1, %v1390
        %v1392 = vrot.slane %v1021, %v1391
        %v1393 = vsel %vm1385, 1, 0
        %v1394 = vsel %vm1386, 1, 0
        %v1395 = vsel %vm1387, 1, 0
        %v1396 = vsel %vm1388, 1, 0
        %vm1397 = vcmp.eq.s32.totalorder %v1393, 1
        %vm1398 = vcmp.eq.s32.totalorder %v1394, 1
        %vm1399 = vcmp.eq.s32.totalorder %v1395, 1
        %vm1400 = vcmp.eq.s32.totalorder %v1396, 1
        %v1401 = vsel %vm1397, %v1392, %v1384
        %v1402 = vsel %vm1398, %v1392, %v1384
        %v1403 = vsel %vm1399, %v1392, %v1384
        %v1404 = vsel %vm1400, %v1392, %v1384
        %v1405 = vadd.f32 %v1377, %v1401
        %v1406 = vadd.f32 %v1378, %v1402
        %v1407 = vadd.f32 %v1379, %v1403
        %v1408 = vadd.f32 %v1380, %v1404
        %v1409 = vsel %vm1333, %v1392, %v1384
        %v1410 = vsel %vm1334, %v1392, %v1384
        %v1411 = vsel %vm1335, %v1392, %v1384
        %v1412 = vsel %vm1336, %v1392, %v1384
        %1417 = vrot.lane.b32.xlu0 %v1409, 64
        %v1418 = vpop.permute.xlu0 %1417
        %1419 = vrot.lane.b32.xlu0 %v1410, 64
        %v1420 = vpop.permute.xlu0 %1419
        %1421 = vrot.lane.b32.xlu0 %v1411, 64
        %v1422 = vpop.permute.xlu0 %1421
        %1423 = vrot.lane.b32.xlu0 %v1412, 64
        %v1424 = vpop.permute.xlu0 %1423
        %v1429 = vadd.f32 %v1315, %v1418
        %v1430 = vadd.f32 %v1315, %v1420
        %v1431 = vadd.f32 %v1315, %v1422
        %v1432 = vadd.f32 %v1315, %v1424
        %v1433 = vlaneseq
        %v1434 = vshrl.u32 %v1433, 7
        %v1435 = vsub.s32 0, %v1434
        %v1436 = vrot.slane %v1161, %v1435
        %v1437 = vlaneseq
        %v1438 = vshrl.u32 %v1437, 7
        %v1439 = vsub.s32 1, %v1438
        %v1440 = vrot.slane %v1161, %v1439
        %v1441 = vsel %vm1353, %v1440, %v1436
        %v1442 = vsel %vm1354, %v1440, %v1436
        %v1443 = vsel %vm1355, %v1440, %v1436
        %v1444 = vsel %vm1356, %v1440, %v1436
        %v1445 = vadd.f32 %v1429, %v1441
        %v1446 = vadd.f32 %v1430, %v1442
        %v1447 = vadd.f32 %v1431, %v1443
        %v1448 = vadd.f32 %v1432, %v1444
        %v1449 = vsel %vm1397, %v1440, %v1436
        %v1450 = vsel %vm1398, %v1440, %v1436
        %v1451 = vsel %vm1399, %v1440, %v1436
        %v1452 = vsel %vm1400, %v1440, %v1436
        %1457 = vrot.lane.b32.xlu0 %v1449, 64
        %v1458 = vpop.permute.xlu0 %1457
        %1459 = vrot.lane.b32.xlu0 %v1450, 64
        %v1460 = vpop.permute.xlu0 %1459
        %1461 = vrot.lane.b32.xlu0 %v1451, 64
        %v1462 = vpop.permute.xlu0 %1461
        %1463 = vrot.lane.b32.xlu0 %v1452, 64
        %v1464 = vpop.permute.xlu0 %1463
        %v1469 = vadd.f32 %v1445, %v1458
        %v1470 = vadd.f32 %v1446, %v1460
        %v1471 = vadd.f32 %v1447, %v1462
        %v1472 = vadd.f32 %v1448, %v1464
        %v1473 = vlaneseq
        %v1474 = vshrl.u32 %v1473, 7
        %v1475 = vsub.s32 0, %v1474
        %v1476 = vrot.slane %v1163, %v1475
        %v1477 = vlaneseq
        %v1478 = vshrl.u32 %v1477, 7
        %v1479 = vsub.s32 1, %v1478
        %v1480 = vrot.slane %v1163, %v1479
        %v1481 = vsel %vm1333, %v1480, %v1476
        %v1482 = vsel %vm1334, %v1480, %v1476
        %v1483 = vsel %vm1335, %v1480, %v1476
        %v1484 = vsel %vm1336, %v1480, %v1476
        %v1485 = vadd.f32 %v1315, %v1481
        %v1486 = vadd.f32 %v1315, %v1482
        %v1487 = vadd.f32 %v1315, %v1483
        %v1488 = vadd.f32 %v1315, %v1484
        %v1489 = vsel %vm1353, %v1480, %v1476
        %v1490 = vsel %vm1354, %v1480, %v1476
        %v1491 = vsel %vm1355, %v1480, %v1476
        %v1492 = vsel %vm1356, %v1480, %v1476
        %1497 = vrot.lane.b32.xlu0 %v1489, 64
        %v1498 = vpop.permute.xlu0 %1497
        %1499 = vrot.lane.b32.xlu0 %v1490, 64
        %v1500 = vpop.permute.xlu0 %1499
        %1501 = vrot.lane.b32.xlu0 %v1491, 64
        %v1502 = vpop.permute.xlu0 %1501
        %1503 = vrot.lane.b32.xlu0 %v1492, 64
        %v1504 = vpop.permute.xlu0 %1503
        %v1509 = vadd.f32 %v1485, %v1498
        %v1510 = vadd.f32 %v1486, %v1500
        %v1511 = vadd.f32 %v1487, %v1502
        %v1512 = vadd.f32 %v1488, %v1504
        %v1513 = vlaneseq
        %v1514 = vshrl.u32 %v1513, 7
        %v1515 = vsub.s32 0, %v1514
        %v1516 = vrot.slane %v1302, %v1515
        %v1517 = vlaneseq
        %v1518 = vshrl.u32 %v1517, 7
        %v1519 = vsub.s32 1, %v1518
        %v1520 = vrot.slane %v1302, %v1519
        %v1521 = vsel %vm1397, %v1520, %v1516
        %v1522 = vsel %vm1398, %v1520, %v1516
        %v1523 = vsel %vm1399, %v1520, %v1516
        %v1524 = vsel %vm1400, %v1520, %v1516
        %v1525 = vadd.f32 %v1509, %v1521
        %v1526 = vadd.f32 %v1510, %v1522
        %v1527 = vadd.f32 %v1511, %v1523
        %v1528 = vadd.f32 %v1512, %v1524
        %vm1529 = vcmask 523264
        %1530 = vst.msk [vmem:[%s369] sm:$0xff] %vm1529, %v1405
        %1531 = vst.msk [vmem:[%s369 + $0x8] sm:$0xff] %vm1529, %v1406
        %1532 = vst.msk [vmem:[%s369 + $0x10] sm:$0xff] %vm1529, %v1407
        %1533 = vst.msk [vmem:[%s369 + $0x18] sm:$0xff] %vm1529, %v1408
        %s1534 = scalar_lea.vmem %s369, 32 [#allocation2]
        %1535 = vst.msk [vmem:[%s1534] sm:$0xff] %vm1529, %v1469
        %1536 = vst.msk [vmem:[%s1534 + $0x8] sm:$0xff] %vm1529, %v1470
        %1537 = vst.msk [vmem:[%s1534 + $0x10] sm:$0xff] %vm1529, %v1471
        %1538 = vst.msk [vmem:[%s1534 + $0x18] sm:$0xff] %vm1529, %v1472
        %s1539 = scalar_lea.vmem %s369, 64 [#allocation2]
        %1540 = vst.msk [vmem:[%s1539] sm:$0xff] %vm1529, %v1469
        %1541 = vst.msk [vmem:[%s1539 + $0x8] sm:$0xff] %vm1529, %v1470
        %1542 = vst.msk [vmem:[%s1539 + $0x10] sm:$0xff] %vm1529, %v1471
        %1543 = vst.msk [vmem:[%s1539 + $0x18] sm:$0xff] %vm1529, %v1472
        %s1544 = scalar_lea.vmem %s369, 96 [#allocation2]
        %1545 = vst.msk [vmem:[%s1544] sm:$0xff] %vm1529, %v1469
        %1546 = vst.msk [vmem:[%s1544 + $0x8] sm:$0xff] %vm1529, %v1470
        %1547 = vst.msk [vmem:[%s1544 + $0x10] sm:$0xff] %vm1529, %v1471
        %1548 = vst.msk [vmem:[%s1544 + $0x18] sm:$0xff] %vm1529, %v1472
        %s1549 = scalar_lea.vmem %s369, 128 [#allocation2]
        %1550 = vst.msk [vmem:[%s1549] sm:$0xff] %vm1529, %v1469
        %1551 = vst.msk [vmem:[%s1549 + $0x8] sm:$0xff] %vm1529, %v1470
        %1552 = vst.msk [vmem:[%s1549 + $0x10] sm:$0xff] %vm1529, %v1471
        %1553 = vst.msk [vmem:[%s1549 + $0x18] sm:$0xff] %vm1529, %v1472
        %s1554 = scalar_lea.vmem %s369, 160 [#allocation2]
        %1555 = vst.msk [vmem:[%s1554] sm:$0xff] %vm1529, %v1469
        %1556 = vst.msk [vmem:[%s1554 + $0x8] sm:$0xff] %vm1529, %v1470
        %1557 = vst.msk [vmem:[%s1554 + $0x10] sm:$0xff] %vm1529, %v1471
        %1558 = vst.msk [vmem:[%s1554 + $0x18] sm:$0xff] %vm1529, %v1472
        %s1559 = scalar_lea.vmem %s369, 192 [#allocation2]
        %1560 = vst.msk [vmem:[%s1559] sm:$0xff] %vm1529, %v1469
        %1561 = vst.msk [vmem:[%s1559 + $0x8] sm:$0xff] %vm1529, %v1470
        %1562 = vst.msk [vmem:[%s1559 + $0x10] sm:$0xff] %vm1529, %v1471
        %1563 = vst.msk [vmem:[%s1559 + $0x18] sm:$0xff] %vm1529, %v1472
        %s1564 = scalar_lea.vmem %s369, 224 [#allocation2]
        %1565 = vst.msk [vmem:[%s1564] sm:$0xff] %vm1529, %v1469
        %1566 = vst.msk [vmem:[%s1564 + $0x8] sm:$0xff] %vm1529, %v1470
        %1567 = vst.msk [vmem:[%s1564 + $0x10] sm:$0xff] %vm1529, %v1471
        %1568 = vst.msk [vmem:[%s1564 + $0x18] sm:$0xff] %vm1529, %v1472
        %s1569 = scalar_lea.vmem %s369, 256 [#allocation2]
        %1570 = vst.msk [vmem:[%s1569] sm:$0xff] %vm1529, %v1469
        %1571 = vst.msk [vmem:[%s1569 + $0x8] sm:$0xff] %vm1529, %v1470
        %1572 = vst.msk [vmem:[%s1569 + $0x10] sm:$0xff] %vm1529, %v1471
        %1573 = vst.msk [vmem:[%s1569 + $0x18] sm:$0xff] %vm1529, %v1472
        %s1574 = scalar_lea.vmem %s369, 288 [#allocation2]
        %1575 = vst.msk [vmem:[%s1574] sm:$0xff] %vm1529, %v1469
        %1576 = vst.msk [vmem:[%s1574 + $0x8] sm:$0xff] %vm1529, %v1470
        %1577 = vst.msk [vmem:[%s1574 + $0x10] sm:$0xff] %vm1529, %v1471
        %1578 = vst.msk [vmem:[%s1574 + $0x18] sm:$0xff] %vm1529, %v1472
        %s1579 = scalar_lea.vmem %s369, 320 [#allocation2]
        %1580 = vst.msk [vmem:[%s1579] sm:$0xff] %vm1529, %v1469
        %1581 = vst.msk [vmem:[%s1579 + $0x8] sm:$0xff] %vm1529, %v1470
        %1582 = vst.msk [vmem:[%s1579 + $0x10] sm:$0xff] %vm1529, %v1471
        %1583 = vst.msk [vmem:[%s1579 + $0x18] sm:$0xff] %vm1529, %v1472
        %s1584 = scalar_lea.vmem %s369, 352 [#allocation2]
        %1585 = vst.msk [vmem:[%s1584] sm:$0xff] %vm1529, %v1469
        %1586 = vst.msk [vmem:[%s1584 + $0x8] sm:$0xff] %vm1529, %v1470
        %1587 = vst.msk [vmem:[%s1584 + $0x10] sm:$0xff] %vm1529, %v1471
        %1588 = vst.msk [vmem:[%s1584 + $0x18] sm:$0xff] %vm1529, %v1472
        %s1589 = scalar_lea.vmem %s369, 384 [#allocation2]
        %1590 = vst.msk [vmem:[%s1589] sm:$0xff] %vm1529, %v1469
        %1591 = vst.msk [vmem:[%s1589 + $0x8] sm:$0xff] %vm1529, %v1470
        %1592 = vst.msk [vmem:[%s1589 + $0x10] sm:$0xff] %vm1529, %v1471
        %1593 = vst.msk [vmem:[%s1589 + $0x18] sm:$0xff] %vm1529, %v1472
        %s1594 = scalar_lea.vmem %s369, 416 [#allocation2]
        %1595 = vst.msk [vmem:[%s1594] sm:$0xff] %vm1529, %v1469
        %1596 = vst.msk [vmem:[%s1594 + $0x8] sm:$0xff] %vm1529, %v1470
        %1597 = vst.msk [vmem:[%s1594 + $0x10] sm:$0xff] %vm1529, %v1471
        %1598 = vst.msk [vmem:[%s1594 + $0x18] sm:$0xff] %vm1529, %v1472
        %s1599 = scalar_lea.vmem %s369, 448 [#allocation2]
        %1600 = vst.msk [vmem:[%s1599] sm:$0xff] %vm1529, %v1469
        %1601 = vst.msk [vmem:[%s1599 + $0x8] sm:$0xff] %vm1529, %v1470
        %1602 = vst.msk [vmem:[%s1599 + $0x10] sm:$0xff] %vm1529, %v1471
        %1603 = vst.msk [vmem:[%s1599 + $0x18] sm:$0xff] %vm1529, %v1472
        %s1604 = scalar_lea.vmem %s369, 480 [#allocation2]
        %1605 = vst.msk [vmem:[%s1604] sm:$0xff] %vm1529, %v1525
        %1606 = vst.msk [vmem:[%s1604 + $0x8] sm:$0xff] %vm1529, %v1526
        %1607 = vst.msk [vmem:[%s1604 + $0x10] sm:$0xff] %vm1529, %v1527
        %1608 = vst.msk [vmem:[%s1604 + $0x18] sm:$0xff] %vm1529, %v1528
        %s1609 = sand.u32 %s223, 1
        %s1610 = scalar_lea.sflag [#allocation3], %s1609
        %s1611 = sand.u32 %s223, 1
        %s1612 = smul.addr %s1611, 512
        %s1613 = scalar_lea.vmem [#allocation2], %s1612
        // Predicated region
        $region49: #{pyramid_features_no_skip.1} parent=47 // pred_check
          %p1614 = pneg %p233
        $region50: #{pyramid_features_no_skip.1} parent=47 // pred_check_branch
          %1616 = sbr.rel (%p1614) target = $region52
        $region51: #{pyramid_features_no_skip.1} parent=47 // pred_region
          %s1617 = smul.u32 16, %s26
          %s1619 = ssub.s32 8192, 8192
          %1620 = vsyncadd %s1610, %s1619
          %s1621 = smul.addr %s1617, 4
          %s1622 = smul.addr %s25, 128
          %s1623 = sadd.s32 %s1621, %s1622
          %s1624 = smul.addr %s1623, 128
          %s1625 = scalar_lea.hbm %s7, %s1624
          %s1626 = sshll.u32 %s1613, 4
          %s1627 = int_to_ptr.vmem [resolvable:$true] %s1626
          %1632 = dma.vmem_to_hbm [thread:$0]  %s1627, 8192, %s1625, %s1610, 128, 128, 8
        $region52: #{pyramid_features_no_skip.1} parent=47 // pred_fallthru
          _
      $region48: #{pyramid_features_no_skip.1} parent=5 // pred_fallthru
        _
      %p1633 = scmp.le.s32.totalorder 2, %s16
      // Predicated region
      $region53: #{pyramid_features_no_skip.1} parent=5 // pred_check
        %p1634 = pneg %p1633
      $region54: #{pyramid_features_no_skip.1} parent=5 // pred_check_branch
        %1636 = sbr.rel (%p1634) target = $region56
      $region55: #{pyramid_features_no_skip.1} parent=5 // pred_region
        %s1637 = ssub.s32 %s16, 2
        // Predicated region
        $region57: #{pyramid_features_no_skip.1} parent=55 // pred_check
          %p1638 = pneg %p239
        $region58: #{pyramid_features_no_skip.1} parent=55 // pred_check_branch
          %1640 = sbr.rel (%p1638) target = $region60
        $region59: #{pyramid_features_no_skip.1} parent=55 // pred_region
          %s1641 = sand.u32 %s224, 1
          %s1642 = scalar_lea.sflag [#allocation3], %s1641
          %s1643 = sand.u32 %s224, 1
          %s1644 = smul.addr %s1643, 512
          %s1645 = scalar_lea.vmem [#allocation2], %s1644
          %1646 = dma.done %s1642, 8192
        $region60: #{pyramid_features_no_skip.1} parent=55 // pred_fallthru
          _
      $region56: #{pyramid_features_no_skip.1} parent=5 // pred_fallthru
        _
    $region6: #{pyramid_features_no_skip.1} parent=1 // loop_footer
      %s20 = sadd.s32 1, %s16
    $region7: #{pyramid_features_no_skip.1} parent=1 // loop_footer_branch
      %15 = sbr.rel target = $region3
    $region8: #{pyramid_features_no_skip.1} parent=1 // loop_exit
      _
    %1647 = vsyncpa [#allocation3], 1
    %s1648 = scalar_lea.sflag [#allocation3], 1
    %1649 = vsyncpa %s1648, 1

</llo_original>
